<compile_context>
chip_gen: v7x
topology: tpu7x:2x2x1
jax: 0.10.0
libtpu: 0.0.40
codegen_flags: <defaults>
</compile_context>

<pallas_src>
import functools

import jax
import jax.numpy as jnp
from jax.experimental import pallas as pl
from jax.experimental.pallas import tpu as pltpu

LANE = 128  # TPU lane width: the Q head is padded to this for the MXU matmul.


def _round_up(n, m):
    return ((n + m - 1) // m) * m


def dqn_kernel(x_ref, w1_ref, b1_ref, w2_ref, b2_ref, w3_ref, b3_ref, o_ref):
    # Layer 1: Linear + ReLU, fully f32 (K = input_dim is tiny; MXU cost ~0,
    # and it keeps full precision on the raw observations).
    h1 = jnp.dot(x_ref[...], w1_ref[...], preferred_element_type=jnp.float32)
    h1 = jnp.maximum(h1 + b1_ref[...], 0.0)

    # Layer 2: Linear + ReLU (bf16 MXU inputs, f32 accumulation, f32 epilogue).
    h2 = jnp.dot(h1.astype(jnp.bfloat16), w2_ref[...],
                 preferred_element_type=jnp.float32)
    h2 = jnp.maximum(h2 + b2_ref[...], 0.0)

    # Layer 3: Q head. w3/b3 are lane-padded to 128 columns (zeros beyond
    # num_actions); slice the real actions before the store so HBM writeback
    # is only num_actions columns wide.
    q = jnp.dot(h2.astype(jnp.bfloat16), w3_ref[...],
                preferred_element_type=jnp.float32)
    q = q + b3_ref[...]
    na = o_ref.shape[-1]
    o_ref[...] = q[:, :na].astype(o_ref.dtype)


def prepare_params(params):
    """One-time parameter prep (do NOT call per inference).

    - Pads the Q head (w3/b3) with zero columns up to a multiple of 128 lanes.
    - Casts the hidden-layer weights (w2, w3) to bf16 for the MXU.
    - Keeps w1/b1/b2/b3 in f32 (layer 1 runs f32; biases are f32 epilogue).
    """
    w1, b1 = params["w1"], params["b1"]
    w2, b2 = params["w2"], params["b2"]
    w3, b3 = params["w3"], params["b3"]

    hidden = w3.shape[0]
    num_actions = w3.shape[1]
    out_pad = _round_up(num_actions, LANE)

    w3p = jnp.zeros((hidden, out_pad), jnp.float32).at[:, :num_actions].set(w3)
    b3p = jnp.zeros((1, out_pad), jnp.float32).at[:, :num_actions].set(b3)

    return {
        "w1": w1.astype(jnp.float32),
        "b1": b1.reshape(1, -1).astype(jnp.float32),
        "w2": w2.astype(jnp.bfloat16),
        "b2": b2.reshape(1, -1).astype(jnp.float32),
        "w3": w3p.astype(jnp.bfloat16),
        "b3": b3p,
    }


@functools.partial(jax.jit, static_argnames=("num_actions", "batch_tile"))
def dqn_forward(x, prepped, *, num_actions, batch_tile=1024):
    """x: (batch, input_dim) f32. prepped: output of prepare_params()."""
    w1, b1 = prepped["w1"], prepped["b1"]
    w2, b2 = prepped["w2"], prepped["b2"]
    w3, b3 = prepped["w3"], prepped["b3"]

    batch, input_dim = x.shape
    hidden = w1.shape[1]
    out_pad = w3.shape[1]

    # Batch tiling: rows are a multiple of 8; a batch that fits one tile runs
    # as a single grid step. Even at batch_tile=4096 the double-buffered x and
    # output blocks are < 1 MiB, comfortably inside v7x's 64 MiB VMEM.
    tile = min(batch_tile, _round_up(batch, 8))
    padded_batch = _round_up(batch, tile)
    if padded_batch != batch:
        x = jnp.pad(x, ((0, padded_batch - batch), (0, 0)))
    n_tiles = padded_batch // tile

    grid_spec = pltpu.PrefetchScalarGridSpec(
        num_scalar_prefetch=0,
        grid=(n_tiles,),
        in_specs=[
            pl.BlockSpec((tile, input_dim), lambda i: (i, 0)),    # x: tiled over batch
            pl.BlockSpec((input_dim, hidden), lambda i: (0, 0)),  # w1 (f32, resident)
            pl.BlockSpec((1, hidden), lambda i: (0, 0)),          # b1
            pl.BlockSpec((hidden, hidden), lambda i: (0, 0)),     # w2 (bf16, resident)
            pl.BlockSpec((1, hidden), lambda i: (0, 0)),          # b2
            pl.BlockSpec((hidden, out_pad), lambda i: (0, 0)),    # w3 (bf16, lane-padded)
            pl.BlockSpec((1, out_pad), lambda i: (0, 0)),         # b3 (lane-padded)
        ],
        # Narrow output block: last dim == full array extent (num_actions), so
        # HBM writeback is only the real Q-values, not 128 padded lanes.
        out_specs=pl.BlockSpec((tile, num_actions), lambda i: (i, 0)),
    )

    q = pl.pallas_call(
        dqn_kernel,
        out_shape=jax.ShapeDtypeStruct((padded_batch, num_actions), jnp.float32),
        grid_spec=grid_spec,
        compiler_params=pltpu.CompilerParams(
            # Batch tiles are independent -> shard across v7x's 2 TensorCores.
            dimension_semantics=("parallel",),
        ),
    )(x, w1, b1, w2, b2, w3, b3)

    return q[:batch]


def init_params(key, input_dim, num_actions, hidden=64):
    """Deterministic synthetic init (Kaiming-uniform-ish), stored as (in, out)."""
    ks = jax.random.split(key, 6)

    def linear(kw, kb, fan_in, fan_out):
        bound = 1.0 / jnp.sqrt(fan_in)
        w = jax.random.uniform(kw, (fan_in, fan_out), jnp.float32, -bound, bound)
        b = jax.random.uniform(kb, (1, fan_out), jnp.float32, -bound, bound)
        return w, b

    w1, b1 = linear(ks[0], ks[1], input_dim, hidden)
    w2, b2 = linear(ks[2], ks[3], hidden, hidden)
    w3, b3 = linear(ks[4], ks[5], hidden, num_actions)
    return {"w1": w1, "b1": b1, "w2": w2, "b2": b2, "w3": w3, "b3": b3}


def dqn_reference(x, params):
    """Plain-JAX f32 reference for the same forward pass."""
    h1 = jnp.maximum(x @ params["w1"] + params["b1"], 0.0)
    h2 = jnp.maximum(h1 @ params["w2"] + params["b2"], 0.0)
    return h2 @ params["w3"] + params["b3"]


if __name__ == "__main__":
    # CartPole-like sizes: observation dim 4, 2 actions. Batch 500 exercises the
    # un-even-batch pad path while still fitting a single grid step (tile=504).
    batch, input_dim, num_actions = 500, 4, 2

    key = jax.random.PRNGKey(0)
    k_x, k_p = jax.random.split(key)
    x = jax.random.normal(k_x, (batch, input_dim), dtype=jnp.float32)
    params = init_params(k_p, input_dim, num_actions)

    prepped = prepare_params(params)  # one-time weight prep (pad + bf16 casts)
    out = dqn_forward(x, prepped, num_actions=num_actions)
    out = jax.block_until_ready(out)

    ref = dqn_reference(x, params)
    assert out.shape == (batch, num_actions)
    # Layer 1 is pure f32; layers 2/3 use bf16 MXU inputs with f32 accumulation
    # -> small, bounded deviation from the pure-f32 reference.
    assert jnp.allclose(out, ref, atol=5e-2, rtol=5e-2), float(
        jnp.max(jnp.abs(out - ref))
    )

    print("KERNEL_OK")
</pallas_src>

<mosaic_0001>
module attributes {stable_mosaic.version = 11 : i64} {
  func.func @dqn_kernel(%arg0: i32, %arg1: memref<504x4xf32, #tpu.memory_space<vmem>>, %arg2: memref<4x64xf32, #tpu.memory_space<vmem>>, %arg3: memref<1x64xf32, #tpu.memory_space<vmem>>, %arg4: memref<64x64xbf16, #tpu.memory_space<vmem>>, %arg5: memref<1x64xf32, #tpu.memory_space<vmem>>, %arg6: memref<64x128xbf16, #tpu.memory_space<vmem>>, %arg7: memref<1x128xf32, #tpu.memory_space<vmem>>, %arg8: memref<504x2xf32, #tpu.memory_space<vmem>>) attributes {dimension_semantics = [#tpu.dimension_semantics<parallel>], iteration_bounds = array<i64: 1>, scalar_prefetch = 0 : i64, scratch_operands = 0 : i64, tpu.core_type = #tpu.core_type<tc>, window_params = [{transform_indices = @transform_0, window_bounds = array<i64: 504, 4>}, {pipeline_mode = #tpu.pipeline_mode<synchronous>, transform_indices = @transform_1, window_bounds = array<i64: 4, 64>}, {pipeline_mode = #tpu.pipeline_mode<synchronous>, transform_indices = @transform_2, window_bounds = array<i64: 1, 64>}, {pipeline_mode = #tpu.pipeline_mode<synchronous>, transform_indices = @transform_3, window_bounds = array<i64: 64, 64>}, {pipeline_mode = #tpu.pipeline_mode<synchronous>, transform_indices = @transform_4, window_bounds = array<i64: 1, 64>}, {pipeline_mode = #tpu.pipeline_mode<synchronous>, transform_indices = @transform_5, window_bounds = array<i64: 64, 128>}, {pipeline_mode = #tpu.pipeline_mode<synchronous>, transform_indices = @transform_6, window_bounds = array<i64: 1, 128>}, {transform_indices = @transform_7, window_bounds = array<i64: 504, 2>}]} {
    %c0 = arith.constant 0 : index
    %c0_0 = arith.constant 0 : index
    %0 = vector.load %arg1[%c0, %c0_0] : memref<504x4xf32, #tpu.memory_space<vmem>>, vector<504x4xf32>
    %c0_1 = arith.constant 0 : index
    %c0_2 = arith.constant 0 : index
    %1 = vector.load %arg2[%c0_1, %c0_2] : memref<4x64xf32, #tpu.memory_space<vmem>>, vector<4x64xf32>
    %cst = arith.constant dense<0.000000e+00> : vector<504x64xf32>
    %2 = tpu.matmul %0, %1, %cst {dimension_numbers = #tpu.dot_dimension_numbers<[1], [0], [0], [1], [0, 0, 1, 1], [], []>} : vector<504x4xf32>, vector<4x64xf32>, vector<504x64xf32> -> vector<504x64xf32>
    %c0_3 = arith.constant 0 : index
    %c0_4 = arith.constant 0 : index
    %3 = vector.load %arg3[%c0_3, %c0_4] : memref<1x64xf32, #tpu.memory_space<vmem>>, vector<1x64xf32>
    %4 = vector.broadcast %3 : vector<1x64xf32> to vector<504x64xf32>
    %5 = arith.addf %2, %4 : vector<504x64xf32>
    %cst_5 = arith.constant 0.000000e+00 : f32
    %6 = vector.broadcast %cst_5 : f32 to vector<504x64xf32>
    %7 = arith.maximumf %5, %6 : vector<504x64xf32>
    %8 = arith.truncf %7 : vector<504x64xf32> to vector<504x64xbf16>
    %c0_6 = arith.constant 0 : index
    %c0_7 = arith.constant 0 : index
    %9 = vector.load %arg4[%c0_6, %c0_7] : memref<64x64xbf16, #tpu.memory_space<vmem>>, vector<64x64xbf16>
    %cst_8 = arith.constant dense<0.000000e+00> : vector<504x64xf32>
    %10 = tpu.matmul %8, %9, %cst_8 {dimension_numbers = #tpu.dot_dimension_numbers<[1], [0], [0], [1], [0, 0, 1, 1], [], []>} : vector<504x64xbf16>, vector<64x64xbf16>, vector<504x64xf32> -> vector<504x64xf32>
    %c0_9 = arith.constant 0 : index
    %c0_10 = arith.constant 0 : index
    %11 = vector.load %arg5[%c0_9, %c0_10] : memref<1x64xf32, #tpu.memory_space<vmem>>, vector<1x64xf32>
    %12 = vector.broadcast %11 : vector<1x64xf32> to vector<504x64xf32>
    %13 = arith.addf %10, %12 : vector<504x64xf32>
    %cst_11 = arith.constant 0.000000e+00 : f32
    %14 = vector.broadcast %cst_11 : f32 to vector<504x64xf32>
    %15 = arith.maximumf %13, %14 : vector<504x64xf32>
    %16 = arith.truncf %15 : vector<504x64xf32> to vector<504x64xbf16>
    %c0_12 = arith.constant 0 : index
    %c0_13 = arith.constant 0 : index
    %17 = vector.load %arg6[%c0_12, %c0_13] : memref<64x128xbf16, #tpu.memory_space<vmem>>, vector<64x128xbf16>
    %cst_14 = arith.constant dense<0.000000e+00> : vector<504x128xf32>
    %18 = tpu.matmul %16, %17, %cst_14 {dimension_numbers = #tpu.dot_dimension_numbers<[1], [0], [0], [1], [0, 0, 1, 1], [], []>} : vector<504x64xbf16>, vector<64x128xbf16>, vector<504x128xf32> -> vector<504x128xf32>
    %c0_15 = arith.constant 0 : index
    %c0_16 = arith.constant 0 : index
    %19 = vector.load %arg7[%c0_15, %c0_16] : memref<1x128xf32, #tpu.memory_space<vmem>>, vector<1x128xf32>
    %20 = vector.broadcast %19 : vector<1x128xf32> to vector<504x128xf32>
    %21 = arith.addf %18, %20 : vector<504x128xf32>
    %22 = vector.extract_strided_slice %21 {offsets = [0, 0], sizes = [504, 2], strides = [1, 1]} : vector<504x128xf32> to vector<504x2xf32>
    %c0_17 = arith.constant 0 : index
    %c0_18 = arith.constant 0 : index
    %23 = vector.load %arg8[%c0_17, %c0_18] : memref<504x2xf32, #tpu.memory_space<vmem>>, vector<504x2xf32>
    tpu.vector_store %arg8[%c0_17, %c0_18], %22 {strides = array<i32>} : memref<504x2xf32, #tpu.memory_space<vmem>>, vector<504x2xf32>,
    return
  }
  func.func @transform_0(%arg0: i32) -> (i32, i32) {
    %c0_i32 = arith.constant 0 : i32
    %c0_i32_0 = arith.constant 0 : i32
    return %arg0, %c0_i32 : i32, i32
  }
  func.func @transform_1(%arg0: i32) -> (i32, i32) {
    %c0_i32 = arith.constant 0 : i32
    %c0_i32_0 = arith.constant 0 : i32
    %c0_i32_1 = arith.constant 0 : i32
    return %c0_i32, %c0_i32_0 : i32, i32
  }
  func.func @transform_2(%arg0: i32) -> (i32, i32) {
    %c0_i32 = arith.constant 0 : i32
    %c0_i32_0 = arith.constant 0 : i32
    %c0_i32_1 = arith.constant 0 : i32
    return %c0_i32, %c0_i32_0 : i32, i32
  }
  func.func @transform_3(%arg0: i32) -> (i32, i32) {
    %c0_i32 = arith.constant 0 : i32
    %c0_i32_0 = arith.constant 0 : i32
    %c0_i32_1 = arith.constant 0 : i32
    return %c0_i32, %c0_i32_0 : i32, i32
  }
  func.func @transform_4(%arg0: i32) -> (i32, i32) {
    %c0_i32 = arith.constant 0 : i32
    %c0_i32_0 = arith.constant 0 : i32
    %c0_i32_1 = arith.constant 0 : i32
    return %c0_i32, %c0_i32_0 : i32, i32
  }
  func.func @transform_5(%arg0: i32) -> (i32, i32) {
    %c0_i32 = arith.constant 0 : i32
    %c0_i32_0 = arith.constant 0 : i32
    %c0_i32_1 = arith.constant 0 : i32
    return %c0_i32, %c0_i32_0 : i32, i32
  }
  func.func @transform_6(%arg0: i32) -> (i32, i32) {
    %c0_i32 = arith.constant 0 : i32
    %c0_i32_0 = arith.constant 0 : i32
    %c0_i32_1 = arith.constant 0 : i32
    return %c0_i32, %c0_i32_0 : i32, i32
  }
  func.func @transform_7(%arg0: i32) -> (i32, i32) {
    %c0_i32 = arith.constant 0 : i32
    %c0_i32_0 = arith.constant 0 : i32
    return %arg0, %c0_i32 : i32, i32
  }
}

</mosaic_0001>

<llo_original>
// kernel: dqn_forward.1
$region0: #{dqn_forward.1}
  #allocation0 [shape = 'u32[]', space=smem, size = 0x4, offset = 0x4, fixed_abs, tag = 'smem constant byte address 0x4 - core index']
  #allocation1 [shape = 'u32[144,128]{1,0:T(1,128)}', space=vmem, size = 0x12000, scoped, tag = 'internal scratch']
  %s0 = inlined_call_operand.vmem [shape: f32[504,4], index: 0, kind: input, shape index: {}]
  %s1 = inlined_call_operand.vmem [shape: f32[4,64], index: 1, kind: input, shape index: {}]
  %s2 = inlined_call_operand.vmem [shape: f32[1,64], index: 2, kind: input, shape index: {}]
  %s3 = inlined_call_operand.vmem [shape: bf16[64,64], index: 3, kind: input, shape index: {}]
  %s4 = inlined_call_operand.vmem [shape: f32[1,64], index: 4, kind: input, shape index: {}]
  %s5 = inlined_call_operand.vmem [shape: bf16[64,128], index: 5, kind: input, shape index: {}]
  %s6 = inlined_call_operand.vmem [shape: f32[1,128], index: 6, kind: input, shape index: {}]
  %s7 = inlined_call_operand.vmem [shape: f32[504,2], index: 7, kind: output, shape index: {}]
  %s8 = sld [smem:[#allocation0]]
  $region38: #{dqn_forward.1} parent=0
    _
  %s10 = ssub.s32 1, %s8
  %s11 = scalar_select 0, %s10, %s8
  // Predicated region
  $region2: #{dqn_forward.1} parent=0 // pred_check
    _
  $region3: #{dqn_forward.1} parent=0 // pred_check_branch
    %13 = sbr.rel (0) target = $region5
  $region4: #{dqn_forward.1} parent=0 // pred_region
    _
  $region5: #{dqn_forward.1} parent=0 // pred_fallthru
    _
  // Predicated region
  $region6: #{dqn_forward.1} parent=0 // pred_check
    _
  $region7: #{dqn_forward.1} parent=0 // pred_check_branch
    %15 = sbr.rel (0) target = $region9
  $region8: #{dqn_forward.1} parent=0 // pred_region
    _
  $region9: #{dqn_forward.1} parent=0 // pred_fallthru
    _
  // Predicated region
  $region10: #{dqn_forward.1} parent=0 // pred_check
    _
  $region11: #{dqn_forward.1} parent=0 // pred_check_branch
    %17 = sbr.rel (0) target = $region13
  $region12: #{dqn_forward.1} parent=0 // pred_region
    _
  $region13: #{dqn_forward.1} parent=0 // pred_fallthru
    _
  // Predicated region
  $region14: #{dqn_forward.1} parent=0 // pred_check
    _
  $region15: #{dqn_forward.1} parent=0 // pred_check_branch
    %19 = sbr.rel (0) target = $region17
  $region16: #{dqn_forward.1} parent=0 // pred_region
    _
  $region17: #{dqn_forward.1} parent=0 // pred_fallthru
    _
  // Predicated region
  $region18: #{dqn_forward.1} parent=0 // pred_check
    _
  $region19: #{dqn_forward.1} parent=0 // pred_check_branch
    %21 = sbr.rel (0) target = $region21
  $region20: #{dqn_forward.1} parent=0 // pred_region
    _
  $region21: #{dqn_forward.1} parent=0 // pred_fallthru
    _
  // Predicated region
  $region22: #{dqn_forward.1} parent=0 // pred_check
    _
  $region23: #{dqn_forward.1} parent=0 // pred_check_branch
    %23 = sbr.rel (0) target = $region25
  $region24: #{dqn_forward.1} parent=0 // pred_region
    _
  $region25: #{dqn_forward.1} parent=0 // pred_fallthru
    _
  // Predicated region
  $region26: #{dqn_forward.1} parent=0 // pred_check
    _
  $region27: #{dqn_forward.1} parent=0 // pred_check_branch
    %25 = sbr.rel (0) target = $region29
  $region28: #{dqn_forward.1} parent=0 // pred_region
    _
  $region29: #{dqn_forward.1} parent=0 // pred_fallthru
    _
  %v27 = vld [vmem:[%s0] sm:$0xff]
  %v28 = vld [vmem:[%s0 + $0x8] sm:$0xff]
  %v29 = vld [vmem:[%s0 + $0x10] sm:$0xff]
  %v30 = vld [vmem:[%s0 + $0x18] sm:$0xff]
  %v31 = vld [vmem:[%s0 + $0x20] sm:$0xff]
  %v32 = vld [vmem:[%s0 + $0x28] sm:$0xff]
  %v33 = vld [vmem:[%s0 + $0x30] sm:$0xff]
  %v34 = vld [vmem:[%s0 + $0x38] sm:$0xff]
  %v35 = vld [vmem:[%s0 + $0x40] sm:$0xff]
  %v36 = vld [vmem:[%s0 + $0x48] sm:$0xff]
  %v37 = vld [vmem:[%s0 + $0x50] sm:$0xff]
  %v38 = vld [vmem:[%s0 + $0x58] sm:$0xff]
  %v39 = vld [vmem:[%s0 + $0x60] sm:$0xff]
  %v40 = vld [vmem:[%s0 + $0x68] sm:$0xff]
  %v41 = vld [vmem:[%s0 + $0x70] sm:$0xff]
  %v42 = vld [vmem:[%s0 + $0x78] sm:$0xff]
  %v43 = vld [vmem:[%s0 + $0x80] sm:$0xff]
  %v44 = vld [vmem:[%s0 + $0x88] sm:$0xff]
  %v45 = vld [vmem:[%s0 + $0x90] sm:$0xff]
  %v46 = vld [vmem:[%s0 + $0x98] sm:$0xff]
  %v47 = vld [vmem:[%s0 + $0xa0] sm:$0xff]
  %v48 = vld [vmem:[%s0 + $0xa8] sm:$0xff]
  %v49 = vld [vmem:[%s0 + $0xb0] sm:$0xff]
  %v50 = vld [vmem:[%s0 + $0xb8] sm:$0xff]
  %v51 = vld [vmem:[%s0 + $0xc0] sm:$0xff]
  %v52 = vld [vmem:[%s0 + $0xc8] sm:$0xff]
  %v53 = vld [vmem:[%s0 + $0xd0] sm:$0xff]
  %v54 = vld [vmem:[%s0 + $0xd8] sm:$0xff]
  %v55 = vld [vmem:[%s0 + $0xe0] sm:$0xff]
  %v56 = vld [vmem:[%s0 + $0xe8] sm:$0xff]
  %v57 = vld [vmem:[%s0 + $0xf0] sm:$0xff]
  %v58 = vld [vmem:[%s0 + $0xf8] sm:$0xff]
  %v59 = vld [vmem:[%s0 + $0x100] sm:$0xff]
  %v60 = vld [vmem:[%s0 + $0x108] sm:$0xff]
  %v61 = vld [vmem:[%s0 + $0x110] sm:$0xff]
  %v62 = vld [vmem:[%s0 + $0x118] sm:$0xff]
  %v63 = vld [vmem:[%s0 + $0x120] sm:$0xff]
  %v64 = vld [vmem:[%s0 + $0x128] sm:$0xff]
  %v65 = vld [vmem:[%s0 + $0x130] sm:$0xff]
  %v66 = vld [vmem:[%s0 + $0x138] sm:$0xff]
  %v67 = vld [vmem:[%s0 + $0x140] sm:$0xff]
  %v68 = vld [vmem:[%s0 + $0x148] sm:$0xff]
  %v69 = vld [vmem:[%s0 + $0x150] sm:$0xff]
  %v70 = vld [vmem:[%s0 + $0x158] sm:$0xff]
  %v71 = vld [vmem:[%s0 + $0x160] sm:$0xff]
  %v72 = vld [vmem:[%s0 + $0x168] sm:$0xff]
  %v73 = vld [vmem:[%s0 + $0x170] sm:$0xff]
  %v74 = vld [vmem:[%s0 + $0x178] sm:$0xff]
  %v75 = vld [vmem:[%s0 + $0x180] sm:$0xff]
  %v76 = vld [vmem:[%s0 + $0x188] sm:$0xff]
  %v77 = vld [vmem:[%s0 + $0x190] sm:$0xff]
  %v78 = vld [vmem:[%s0 + $0x198] sm:$0xff]
  %v79 = vld [vmem:[%s0 + $0x1a0] sm:$0xff]
  %v80 = vld [vmem:[%s0 + $0x1a8] sm:$0xff]
  %v81 = vld [vmem:[%s0 + $0x1b0] sm:$0xff]
  %v82 = vld [vmem:[%s0 + $0x1b8] sm:$0xff]
  %v83 = vld [vmem:[%s0 + $0x1c0] sm:$0xff]
  %v84 = vld [vmem:[%s0 + $0x1c8] sm:$0xff]
  %v85 = vld [vmem:[%s0 + $0x1d0] sm:$0xff]
  %v86 = vld [vmem:[%s0 + $0x1d8] sm:$0xff]
  %v87 = vld [vmem:[%s0 + $0x1e0] sm:$0xff]
  %v88 = vld [vmem:[%s0 + $0x1e8] sm:$0xff]
  %v89 = vld [vmem:[%s0 + $0x1f0] sm:$0xff]
  %v90 = vld [vmem:[%s1] sm:$0xf]
  %v91 = vld [vmem:[%s2] sm:$0x1]
  %v93 = vlaneseq
  %v94 = vshrl.u32 %v93, 7
  %v95 = vsub.s32 0, %v94
  %v96 = vrot.slane %v91, %v95
  %vm98 = vcmask 31744
  %v100 = vsel %vm98, %v27, 0
  %v103 = vsel %vm98, %v28, 0
  %v106 = vsel %vm98, %v29, 0
  %v109 = vsel %vm98, %v30, 0
  %v112 = vsel %vm98, %v31, 0
  %v115 = vsel %vm98, %v32, 0
  %v118 = vsel %vm98, %v33, 0
  %v121 = vsel %vm98, %v34, 0
  %v124 = vsel %vm98, %v35, 0
  %v127 = vsel %vm98, %v36, 0
  %v130 = vsel %vm98, %v37, 0
  %v133 = vsel %vm98, %v38, 0
  %v136 = vsel %vm98, %v39, 0
  %v139 = vsel %vm98, %v40, 0
  %v142 = vsel %vm98, %v41, 0
  %v145 = vsel %vm98, %v42, 0
  %v148 = vsel %vm98, %v43, 0
  %v151 = vsel %vm98, %v44, 0
  %v154 = vsel %vm98, %v45, 0
  %v157 = vsel %vm98, %v46, 0
  %v160 = vsel %vm98, %v47, 0
  %v163 = vsel %vm98, %v48, 0
  %v166 = vsel %vm98, %v49, 0
  %v169 = vsel %vm98, %v50, 0
  %v172 = vsel %vm98, %v51, 0
  %v175 = vsel %vm98, %v52, 0
  %v178 = vsel %vm98, %v53, 0
  %v181 = vsel %vm98, %v54, 0
  %v184 = vsel %vm98, %v55, 0
  %v187 = vsel %vm98, %v56, 0
  %v190 = vsel %vm98, %v57, 0
  %v193 = vsel %vm98, %v58, 0
  %v196 = vsel %vm98, %v59, 0
  %v199 = vsel %vm98, %v60, 0
  %v202 = vsel %vm98, %v61, 0
  %v205 = vsel %vm98, %v62, 0
  %v208 = vsel %vm98, %v63, 0
  %v211 = vsel %vm98, %v64, 0
  %v214 = vsel %vm98, %v65, 0
  %v217 = vsel %vm98, %v66, 0
  %v220 = vsel %vm98, %v67, 0
  %v223 = vsel %vm98, %v68, 0
  %v226 = vsel %vm98, %v69, 0
  %v229 = vsel %vm98, %v70, 0
  %v232 = vsel %vm98, %v71, 0
  %v235 = vsel %vm98, %v72, 0
  %v238 = vsel %vm98, %v73, 0
  %v241 = vsel %vm98, %v74, 0
  %v244 = vsel %vm98, %v75, 0
  %v247 = vsel %vm98, %v76, 0
  %v250 = vsel %vm98, %v77, 0
  %v253 = vsel %vm98, %v78, 0
  %v256 = vsel %vm98, %v79, 0
  %v259 = vsel %vm98, %v80, 0
  %v262 = vsel %vm98, %v81, 0
  %v265 = vsel %vm98, %v82, 0
  %v268 = vsel %vm98, %v83, 0
  %v271 = vsel %vm98, %v84, 0
  %v274 = vsel %vm98, %v85, 0
  %v277 = vsel %vm98, %v86, 0
  %v280 = vsel %vm98, %v87, 0
  %v283 = vsel %vm98, %v88, 0
  %v286 = vsel %vm98, %v89, 0
  %vm288 = vcmask 1043456
  %v290 = vsel %vm288, %v90, 0
  %292 = vmatprep.subr.mxu0 0.0
  %293 = vmatpush1.msra.mxu0 %v290
  %294 = vmatprep.subr.mxu0 0.0
  %295 = vmatpush1.msra.mxu0 0.0
  %296 = vmatprep.subr.mxu0 0.0
  %297 = vmatpush1.msra.mxu0 0.0
  %298 = vmatprep.subr.mxu0 0.0
  %299 = vmatpush1.msra.mxu0 0.0
  %300 = vmatprep.subr.mxu0 0.0
  %301 = vmatpush1.msra.mxu0 0.0
  %302 = vmatprep.subr.mxu0 0.0
  %303 = vmatpush1.msra.mxu0 0.0
  %304 = vmatprep.subr.mxu0 0.0
  %305 = vmatpush1.msra.mxu0 0.0
  %306 = vmatprep.subr.mxu0 0.0
  %307 = vmatpush1.msra.mxu0 0.0
  %308 = vmatprep.subr.mxu0 0.0
  %309 = vmatpush1.msra.mxu0 0.0
  %310 = vmatprep.subr.mxu0 0.0
  %311 = vmatpush1.msra.mxu0 0.0
  %312 = vmatprep.subr.mxu0 0.0
  %313 = vmatpush1.msra.mxu0 0.0
  %314 = vmatprep.subr.mxu0 0.0
  %315 = vmatpush1.msra.mxu0 0.0
  %316 = vmatprep.subr.mxu0 0.0
  %317 = vmatpush1.msra.mxu0 0.0
  %318 = vmatprep.subr.mxu0 0.0
  %319 = vmatpush1.msra.mxu0 0.0
  %320 = vmatprep.subr.mxu0 0.0
  %321 = vmatpush1.msra.mxu0 0.0
  %322 = vmatprep.subr.mxu0 0.0
  %323 = vmatpush1.msra.mxu0 0.0
  %324 = vmatprep.subr.mxu0 0.0
  %325 = vmatpush1.msra.mxu0 0.0
  %326 = vmatprep.subr.mxu0 0.0
  %327 = vmatpush1.msra.mxu0 0.0
  %328 = vmatprep.subr.mxu0 0.0
  %329 = vmatpush1.msra.mxu0 0.0
  %330 = vmatprep.subr.mxu0 0.0
  %331 = vmatpush1.msra.mxu0 0.0
  %332 = vmatprep.subr.mxu0 0.0
  %333 = vmatpush1.msra.mxu0 0.0
  %334 = vmatprep.subr.mxu0 0.0
  %335 = vmatpush1.msra.mxu0 0.0
  %336 = vmatprep.subr.mxu0 0.0
  %337 = vmatpush1.msra.mxu0 0.0
  %338 = vmatprep.subr.mxu0 0.0
  %339 = vmatpush1.msra.mxu0 0.0
  %340 = vmatprep.subr.mxu0 0.0
  %341 = vmatpush1.msra.mxu0 0.0
  %342 = vmatprep.subr.mxu0 0.0
  %343 = vmatpush1.msra.mxu0 0.0
  %344 = vmatprep.subr.mxu0 0.0
  %345 = vmatpush1.msra.mxu0 0.0
  %346 = vmatprep.subr.mxu0 0.0
  %347 = vmatpush1.msra.mxu0 0.0
  %348 = vmatprep.subr.mxu0 0.0
  %349 = vmatpush1.msra.mxu0 0.0
  %350 = vmatprep.subr.mxu0 0.0
  %351 = vmatpush1.msra.mxu0 0.0
  %352 = vmatprep.subr.mxu0 0.0
  %353 = vmatpush1.msra.mxu0 0.0
  %354 = vmatprep.subr.mxu0 0.0
  %355 = vmatpush1.msra.mxu0 0.0
  %356 = vmatprep.mubr.f32.mxu0 0.0
  %357 = vmatmul.mubr.f32.gmra.mrb[0].mxu0 %v100
  %v358 = vpop.f32.mrb[0].mxu0
  %v359 = vadd.f32 %v96, %v358
  %v360 = vpop.f32.mrb[0].mxu0
  %361 = vmatprep.mubr.f32.mxu0 0.0
  %362 = vmatmul.mubr.f32.gmra.mrb[0].mxu0 %v103
  %v363 = vpop.f32.mrb[0].mxu0
  %v364 = vadd.f32 %v96, %v363
  %v365 = vpop.f32.mrb[0].mxu0
  %366 = vmatprep.mubr.f32.mxu0 0.0
  %367 = vmatmul.mubr.f32.gmra.mrb[0].mxu0 %v106
  %v368 = vpop.f32.mrb[0].mxu0
  %v369 = vadd.f32 %v96, %v368
  %v370 = vpop.f32.mrb[0].mxu0
  %371 = vmatprep.mubr.f32.mxu0 0.0
  %372 = vmatmul.mubr.f32.gmra.mrb[0].mxu0 %v109
  %v373 = vpop.f32.mrb[0].mxu0
  %v374 = vadd.f32 %v96, %v373
  %v375 = vpop.f32.mrb[0].mxu0
  %376 = vmatprep.mubr.f32.mxu0 0.0
  %377 = vmatmul.mubr.f32.gmra.mrb[0].mxu0 %v112
  %v378 = vpop.f32.mrb[0].mxu0
  %v379 = vadd.f32 %v96, %v378
  %v380 = vpop.f32.mrb[0].mxu0
  %381 = vmatprep.mubr.f32.mxu0 0.0
  %382 = vmatmul.mubr.f32.gmra.mrb[0].mxu0 %v115
  %v383 = vpop.f32.mrb[0].mxu0
  %v384 = vadd.f32 %v96, %v383
  %v385 = vpop.f32.mrb[0].mxu0
  %386 = vmatprep.mubr.f32.mxu0 0.0
  %387 = vmatmul.mubr.f32.gmra.mrb[0].mxu0 %v118
  %v388 = vpop.f32.mrb[0].mxu0
  %v389 = vadd.f32 %v96, %v388
  %v390 = vpop.f32.mrb[0].mxu0
  %391 = vmatprep.mubr.f32.mxu0 0.0
  %392 = vmatmul.mubr.f32.gmra.mrb[0].mxu0 %v121
  %v393 = vpop.f32.mrb[0].mxu0
  %v394 = vadd.f32 %v96, %v393
  %v395 = vpop.f32.mrb[0].mxu0
  %396 = vmatprep.mubr.f32.mxu0 0.0
  %397 = vmatmul.mubr.f32.gmra.mrb[0].mxu0 %v124
  %v398 = vpop.f32.mrb[0].mxu0
  %v399 = vadd.f32 %v96, %v398
  %v400 = vpop.f32.mrb[0].mxu0
  %401 = vmatprep.mubr.f32.mxu0 0.0
  %402 = vmatmul.mubr.f32.gmra.mrb[0].mxu0 %v127
  %v403 = vpop.f32.mrb[0].mxu0
  %v404 = vadd.f32 %v96, %v403
  %v405 = vpop.f32.mrb[0].mxu0
  %406 = vmatprep.mubr.f32.mxu0 0.0
  %407 = vmatmul.mubr.f32.gmra.mrb[0].mxu0 %v130
  %v408 = vpop.f32.mrb[0].mxu0
  %v409 = vadd.f32 %v96, %v408
  %v410 = vpop.f32.mrb[0].mxu0
  %411 = vmatprep.mubr.f32.mxu0 0.0
  %412 = vmatmul.mubr.f32.gmra.mrb[0].mxu0 %v133
  %v413 = vpop.f32.mrb[0].mxu0
  %v414 = vadd.f32 %v96, %v413
  %v415 = vpop.f32.mrb[0].mxu0
  %416 = vmatprep.mubr.f32.mxu0 0.0
  %417 = vmatmul.mubr.f32.gmra.mrb[0].mxu0 %v136
  %v418 = vpop.f32.mrb[0].mxu0
  %v419 = vadd.f32 %v96, %v418
  %v420 = vpop.f32.mrb[0].mxu0
  %421 = vmatprep.mubr.f32.mxu0 0.0
  %422 = vmatmul.mubr.f32.gmra.mrb[0].mxu0 %v139
  %v423 = vpop.f32.mrb[0].mxu0
  %v424 = vadd.f32 %v96, %v423
  %v425 = vpop.f32.mrb[0].mxu0
  %426 = vmatprep.mubr.f32.mxu0 0.0
  %427 = vmatmul.mubr.f32.gmra.mrb[0].mxu0 %v142
  %v428 = vpop.f32.mrb[0].mxu0
  %v429 = vadd.f32 %v96, %v428
  %v430 = vpop.f32.mrb[0].mxu0
  %431 = vmatprep.mubr.f32.mxu0 0.0
  %432 = vmatmul.mubr.f32.gmra.mrb[0].mxu0 %v145
  %v433 = vpop.f32.mrb[0].mxu0
  %v434 = vadd.f32 %v96, %v433
  %v435 = vpop.f32.mrb[0].mxu0
  %436 = vmatprep.mubr.f32.mxu0 0.0
  %437 = vmatmul.mubr.f32.gmra.mrb[0].mxu0 %v148
  %v438 = vpop.f32.mrb[0].mxu0
  %v439 = vadd.f32 %v96, %v438
  %v440 = vpop.f32.mrb[0].mxu0
  %441 = vmatprep.mubr.f32.mxu0 0.0
  %442 = vmatmul.mubr.f32.gmra.mrb[0].mxu0 %v151
  %v443 = vpop.f32.mrb[0].mxu0
  %v444 = vadd.f32 %v96, %v443
  %v445 = vpop.f32.mrb[0].mxu0
  %446 = vmatprep.mubr.f32.mxu0 0.0
  %447 = vmatmul.mubr.f32.gmra.mrb[0].mxu0 %v154
  %v448 = vpop.f32.mrb[0].mxu0
  %v449 = vadd.f32 %v96, %v448
  %v450 = vpop.f32.mrb[0].mxu0
  %451 = vmatprep.mubr.f32.mxu0 0.0
  %452 = vmatmul.mubr.f32.gmra.mrb[0].mxu0 %v157
  %v453 = vpop.f32.mrb[0].mxu0
  %v454 = vadd.f32 %v96, %v453
  %v455 = vpop.f32.mrb[0].mxu0
  %456 = vmatprep.mubr.f32.mxu0 0.0
  %457 = vmatmul.mubr.f32.gmra.mrb[0].mxu0 %v160
  %v458 = vpop.f32.mrb[0].mxu0
  %v459 = vadd.f32 %v96, %v458
  %v460 = vpop.f32.mrb[0].mxu0
  %461 = vmatprep.mubr.f32.mxu0 0.0
  %462 = vmatmul.mubr.f32.gmra.mrb[0].mxu0 %v163
  %v463 = vpop.f32.mrb[0].mxu0
  %v464 = vadd.f32 %v96, %v463
  %v465 = vpop.f32.mrb[0].mxu0
  %466 = vmatprep.mubr.f32.mxu0 0.0
  %467 = vmatmul.mubr.f32.gmra.mrb[0].mxu0 %v166
  %v468 = vpop.f32.mrb[0].mxu0
  %v469 = vadd.f32 %v96, %v468
  %v470 = vpop.f32.mrb[0].mxu0
  %471 = vmatprep.mubr.f32.mxu0 0.0
  %472 = vmatmul.mubr.f32.gmra.mrb[0].mxu0 %v169
  %v473 = vpop.f32.mrb[0].mxu0
  %v474 = vadd.f32 %v96, %v473
  %v475 = vpop.f32.mrb[0].mxu0
  %476 = vmatprep.mubr.f32.mxu0 0.0
  %477 = vmatmul.mubr.f32.gmra.mrb[0].mxu0 %v172
  %v478 = vpop.f32.mrb[0].mxu0
  %v479 = vadd.f32 %v96, %v478
  %v480 = vpop.f32.mrb[0].mxu0
  %481 = vmatprep.mubr.f32.mxu0 0.0
  %482 = vmatmul.mubr.f32.gmra.mrb[0].mxu0 %v175
  %v483 = vpop.f32.mrb[0].mxu0
  %v484 = vadd.f32 %v96, %v483
  %v485 = vpop.f32.mrb[0].mxu0
  %486 = vmatprep.mubr.f32.mxu0 0.0
  %487 = vmatmul.mubr.f32.gmra.mrb[0].mxu0 %v178
  %v488 = vpop.f32.mrb[0].mxu0
  %v489 = vadd.f32 %v96, %v488
  %v490 = vpop.f32.mrb[0].mxu0
  %491 = vmatprep.mubr.f32.mxu0 0.0
  %492 = vmatmul.mubr.f32.gmra.mrb[0].mxu0 %v181
  %v493 = vpop.f32.mrb[0].mxu0
  %v494 = vadd.f32 %v96, %v493
  %v495 = vpop.f32.mrb[0].mxu0
  %496 = vmatprep.mubr.f32.mxu0 0.0
  %497 = vmatmul.mubr.f32.gmra.mrb[0].mxu0 %v184
  %v498 = vpop.f32.mrb[0].mxu0
  %v499 = vadd.f32 %v96, %v498
  %v500 = vpop.f32.mrb[0].mxu0
  %501 = vmatprep.mubr.f32.mxu0 0.0
  %502 = vmatmul.mubr.f32.gmra.mrb[0].mxu0 %v187
  %v503 = vpop.f32.mrb[0].mxu0
  %v504 = vadd.f32 %v96, %v503
  %v505 = vpop.f32.mrb[0].mxu0
  %506 = vmatprep.mubr.f32.mxu0 0.0
  %507 = vmatmul.mubr.f32.gmra.mrb[0].mxu0 %v190
  %v508 = vpop.f32.mrb[0].mxu0
  %v509 = vadd.f32 %v96, %v508
  %v510 = vpop.f32.mrb[0].mxu0
  %511 = vmatprep.mubr.f32.mxu0 0.0
  %512 = vmatmul.mubr.f32.gmra.mrb[0].mxu0 %v193
  %v513 = vpop.f32.mrb[0].mxu0
  %v514 = vadd.f32 %v96, %v513
  %v515 = vpop.f32.mrb[0].mxu0
  %516 = vmatprep.mubr.f32.mxu0 0.0
  %517 = vmatmul.mubr.f32.gmra.mrb[0].mxu0 %v196
  %v518 = vpop.f32.mrb[0].mxu0
  %v519 = vadd.f32 %v96, %v518
  %v520 = vpop.f32.mrb[0].mxu0
  %521 = vmatprep.mubr.f32.mxu0 0.0
  %522 = vmatmul.mubr.f32.gmra.mrb[0].mxu0 %v199
  %v523 = vpop.f32.mrb[0].mxu0
  %v524 = vadd.f32 %v96, %v523
  %v525 = vpop.f32.mrb[0].mxu0
  %526 = vmatprep.mubr.f32.mxu0 0.0
  %527 = vmatmul.mubr.f32.gmra.mrb[0].mxu0 %v202
  %v528 = vpop.f32.mrb[0].mxu0
  %v529 = vadd.f32 %v96, %v528
  %v530 = vpop.f32.mrb[0].mxu0
  %531 = vmatprep.mubr.f32.mxu0 0.0
  %532 = vmatmul.mubr.f32.gmra.mrb[0].mxu0 %v205
  %v533 = vpop.f32.mrb[0].mxu0
  %v534 = vadd.f32 %v96, %v533
  %v535 = vpop.f32.mrb[0].mxu0
  %536 = vmatprep.mubr.f32.mxu0 0.0
  %537 = vmatmul.mubr.f32.gmra.mrb[0].mxu0 %v208
  %v538 = vpop.f32.mrb[0].mxu0
  %v539 = vadd.f32 %v96, %v538
  %v540 = vpop.f32.mrb[0].mxu0
  %541 = vmatprep.mubr.f32.mxu0 0.0
  %542 = vmatmul.mubr.f32.gmra.mrb[0].mxu0 %v211
  %v543 = vpop.f32.mrb[0].mxu0
  %v544 = vadd.f32 %v96, %v543
  %v545 = vpop.f32.mrb[0].mxu0
  %546 = vmatprep.mubr.f32.mxu0 0.0
  %547 = vmatmul.mubr.f32.gmra.mrb[0].mxu0 %v214
  %v548 = vpop.f32.mrb[0].mxu0
  %v549 = vadd.f32 %v96, %v548
  %v550 = vpop.f32.mrb[0].mxu0
  %551 = vmatprep.mubr.f32.mxu0 0.0
  %552 = vmatmul.mubr.f32.gmra.mrb[0].mxu0 %v217
  %v553 = vpop.f32.mrb[0].mxu0
  %v554 = vadd.f32 %v96, %v553
  %v555 = vpop.f32.mrb[0].mxu0
  %556 = vmatprep.mubr.f32.mxu0 0.0
  %557 = vmatmul.mubr.f32.gmra.mrb[0].mxu0 %v220
  %v558 = vpop.f32.mrb[0].mxu0
  %v559 = vadd.f32 %v96, %v558
  %v560 = vpop.f32.mrb[0].mxu0
  %561 = vmatprep.mubr.f32.mxu0 0.0
  %562 = vmatmul.mubr.f32.gmra.mrb[0].mxu0 %v223
  %v563 = vpop.f32.mrb[0].mxu0
  %v564 = vadd.f32 %v96, %v563
  %v565 = vpop.f32.mrb[0].mxu0
  %566 = vmatprep.mubr.f32.mxu0 0.0
  %567 = vmatmul.mubr.f32.gmra.mrb[0].mxu0 %v226
  %v568 = vpop.f32.mrb[0].mxu0
  %v569 = vadd.f32 %v96, %v568
  %v570 = vpop.f32.mrb[0].mxu0
  %571 = vmatprep.mubr.f32.mxu0 0.0
  %572 = vmatmul.mubr.f32.gmra.mrb[0].mxu0 %v229
  %v573 = vpop.f32.mrb[0].mxu0
  %v574 = vadd.f32 %v96, %v573
  %v575 = vpop.f32.mrb[0].mxu0
  %576 = vmatprep.mubr.f32.mxu0 0.0
  %577 = vmatmul.mubr.f32.gmra.mrb[0].mxu0 %v232
  %v578 = vpop.f32.mrb[0].mxu0
  %v579 = vadd.f32 %v96, %v578
  %v580 = vpop.f32.mrb[0].mxu0
  %581 = vmatprep.mubr.f32.mxu0 0.0
  %582 = vmatmul.mubr.f32.gmra.mrb[0].mxu0 %v235
  %v583 = vpop.f32.mrb[0].mxu0
  %v584 = vadd.f32 %v96, %v583
  %v585 = vpop.f32.mrb[0].mxu0
  %586 = vmatprep.mubr.f32.mxu0 0.0
  %587 = vmatmul.mubr.f32.gmra.mrb[0].mxu0 %v238
  %v588 = vpop.f32.mrb[0].mxu0
  %v589 = vadd.f32 %v96, %v588
  %v590 = vpop.f32.mrb[0].mxu0
  %591 = vmatprep.mubr.f32.mxu0 0.0
  %592 = vmatmul.mubr.f32.gmra.mrb[0].mxu0 %v241
  %v593 = vpop.f32.mrb[0].mxu0
  %v594 = vadd.f32 %v96, %v593
  %v595 = vpop.f32.mrb[0].mxu0
  %596 = vmatprep.mubr.f32.mxu0 0.0
  %597 = vmatmul.mubr.f32.gmra.mrb[0].mxu0 %v244
  %v598 = vpop.f32.mrb[0].mxu0
  %v599 = vadd.f32 %v96, %v598
  %v600 = vpop.f32.mrb[0].mxu0
  %601 = vmatprep.mubr.f32.mxu0 0.0
  %602 = vmatmul.mubr.f32.gmra.mrb[0].mxu0 %v247
  %v603 = vpop.f32.mrb[0].mxu0
  %v604 = vadd.f32 %v96, %v603
  %v605 = vpop.f32.mrb[0].mxu0
  %606 = vmatprep.mubr.f32.mxu0 0.0
  %607 = vmatmul.mubr.f32.gmra.mrb[0].mxu0 %v250
  %v608 = vpop.f32.mrb[0].mxu0
  %v609 = vadd.f32 %v96, %v608
  %v610 = vpop.f32.mrb[0].mxu0
  %611 = vmatprep.mubr.f32.mxu0 0.0
  %612 = vmatmul.mubr.f32.gmra.mrb[0].mxu0 %v253
  %v613 = vpop.f32.mrb[0].mxu0
  %v614 = vadd.f32 %v96, %v613
  %v615 = vpop.f32.mrb[0].mxu0
  %616 = vmatprep.mubr.f32.mxu0 0.0
  %617 = vmatmul.mubr.f32.gmra.mrb[0].mxu0 %v256
  %v618 = vpop.f32.mrb[0].mxu0
  %v619 = vadd.f32 %v96, %v618
  %v620 = vpop.f32.mrb[0].mxu0
  %621 = vmatprep.mubr.f32.mxu0 0.0
  %622 = vmatmul.mubr.f32.gmra.mrb[0].mxu0 %v259
  %v623 = vpop.f32.mrb[0].mxu0
  %v624 = vadd.f32 %v96, %v623
  %v625 = vpop.f32.mrb[0].mxu0
  %626 = vmatprep.mubr.f32.mxu0 0.0
  %627 = vmatmul.mubr.f32.gmra.mrb[0].mxu0 %v262
  %v628 = vpop.f32.mrb[0].mxu0
  %v629 = vadd.f32 %v96, %v628
  %v630 = vpop.f32.mrb[0].mxu0
  %631 = vmatprep.mubr.f32.mxu0 0.0
  %632 = vmatmul.mubr.f32.gmra.mrb[0].mxu0 %v265
  %v633 = vpop.f32.mrb[0].mxu0
  %v634 = vadd.f32 %v96, %v633
  %v635 = vpop.f32.mrb[0].mxu0
  %636 = vmatprep.mubr.f32.mxu0 0.0
  %637 = vmatmul.mubr.f32.gmra.mrb[0].mxu0 %v268
  %v638 = vpop.f32.mrb[0].mxu0
  %v639 = vadd.f32 %v96, %v638
  %v640 = vpop.f32.mrb[0].mxu0
  %641 = vmatprep.mubr.f32.mxu0 0.0
  %642 = vmatmul.mubr.f32.gmra.mrb[0].mxu0 %v271
  %v643 = vpop.f32.mrb[0].mxu0
  %v644 = vadd.f32 %v96, %v643
  %v645 = vpop.f32.mrb[0].mxu0
  %646 = vmatprep.mubr.f32.mxu0 0.0
  %647 = vmatmul.mubr.f32.gmra.mrb[0].mxu0 %v274
  %v648 = vpop.f32.mrb[0].mxu0
  %v649 = vadd.f32 %v96, %v648
  %v650 = vpop.f32.mrb[0].mxu0
  %651 = vmatprep.mubr.f32.mxu0 0.0
  %652 = vmatmul.mubr.f32.gmra.mrb[0].mxu0 %v277
  %v653 = vpop.f32.mrb[0].mxu0
  %v654 = vadd.f32 %v96, %v653
  %v655 = vpop.f32.mrb[0].mxu0
  %656 = vmatprep.mubr.f32.mxu0 0.0
  %657 = vmatmul.mubr.f32.gmra.mrb[0].mxu0 %v280
  %v658 = vpop.f32.mrb[0].mxu0
  %v659 = vadd.f32 %v96, %v658
  %v660 = vpop.f32.mrb[0].mxu0
  %661 = vmatprep.mubr.f32.mxu0 0.0
  %662 = vmatmul.mubr.f32.gmra.mrb[0].mxu0 %v283
  %v663 = vpop.f32.mrb[0].mxu0
  %v664 = vadd.f32 %v96, %v663
  %v665 = vpop.f32.mrb[0].mxu0
  %666 = vmatprep.mubr.f32.mxu0 0.0
  %667 = vmatmul.mubr.f32.gmra.mrb[0].mxu0 %v286
  %v668 = vpop.f32.mrb[0].mxu0
  %v669 = vadd.f32 %v96, %v668
  %v670 = vpop.f32.mrb[0].mxu0
  %671 = vdwg.mxu0
  %v672 = vmax.f32 %v359, 0.0
  %v673 = vmax.f32 %v364, 0.0
  %v674 = vmax.f32 %v369, 0.0
  %v675 = vmax.f32 %v374, 0.0
  %v676 = vmax.f32 %v379, 0.0
  %v677 = vmax.f32 %v384, 0.0
  %v678 = vmax.f32 %v389, 0.0
  %v679 = vmax.f32 %v394, 0.0
  %v680 = vmax.f32 %v399, 0.0
  %v681 = vmax.f32 %v404, 0.0
  %v682 = vmax.f32 %v409, 0.0
  %v683 = vmax.f32 %v414, 0.0
  %v684 = vmax.f32 %v419, 0.0
  %v685 = vmax.f32 %v424, 0.0
  %v686 = vmax.f32 %v429, 0.0
  %v687 = vmax.f32 %v434, 0.0
  %v688 = vmax.f32 %v439, 0.0
  %v689 = vmax.f32 %v444, 0.0
  %v690 = vmax.f32 %v449, 0.0
  %v691 = vmax.f32 %v454, 0.0
  %v692 = vmax.f32 %v459, 0.0
  %v693 = vmax.f32 %v464, 0.0
  %v694 = vmax.f32 %v469, 0.0
  %v695 = vmax.f32 %v474, 0.0
  %v696 = vmax.f32 %v479, 0.0
  %v697 = vmax.f32 %v484, 0.0
  %v698 = vmax.f32 %v489, 0.0
  %v699 = vmax.f32 %v494, 0.0
  %v700 = vmax.f32 %v499, 0.0
  %v701 = vmax.f32 %v504, 0.0
  %v702 = vmax.f32 %v509, 0.0
  %v703 = vmax.f32 %v514, 0.0
  %v704 = vmax.f32 %v519, 0.0
  %v705 = vmax.f32 %v524, 0.0
  %v706 = vmax.f32 %v529, 0.0
  %v707 = vmax.f32 %v534, 0.0
  %v708 = vmax.f32 %v539, 0.0
  %v709 = vmax.f32 %v544, 0.0
  %v710 = vmax.f32 %v549, 0.0
  %v711 = vmax.f32 %v554, 0.0
  %v712 = vmax.f32 %v559, 0.0
  %v713 = vmax.f32 %v564, 0.0
  %v714 = vmax.f32 %v569, 0.0
  %v715 = vmax.f32 %v574, 0.0
  %v716 = vmax.f32 %v579, 0.0
  %v717 = vmax.f32 %v584, 0.0
  %v718 = vmax.f32 %v589, 0.0
  %v719 = vmax.f32 %v594, 0.0
  %v720 = vmax.f32 %v599, 0.0
  %v721 = vmax.f32 %v604, 0.0
  %v722 = vmax.f32 %v609, 0.0
  %v723 = vmax.f32 %v614, 0.0
  %v724 = vmax.f32 %v619, 0.0
  %v725 = vmax.f32 %v624, 0.0
  %v726 = vmax.f32 %v629, 0.0
  %v727 = vmax.f32 %v634, 0.0
  %v728 = vmax.f32 %v639, 0.0
  %v729 = vmax.f32 %v644, 0.0
  %v730 = vmax.f32 %v649, 0.0
  %v731 = vmax.f32 %v654, 0.0
  %v732 = vmax.f32 %v659, 0.0
  %v733 = vmax.f32 %v664, 0.0
  %v734 = vmax.f32 %v669, 0.0
  %v735 = vpack.c.bf16 %v673, %v672
  %v736 = vpack.c.bf16 %v675, %v674
  %v737 = vpack.c.bf16 %v677, %v676
  %v738 = vpack.c.bf16 %v679, %v678
  %v739 = vpack.c.bf16 %v681, %v680
  %v740 = vpack.c.bf16 %v683, %v682
  %v741 = vpack.c.bf16 %v685, %v684
  %v742 = vpack.c.bf16 %v687, %v686
  %v743 = vpack.c.bf16 %v689, %v688
  %v744 = vpack.c.bf16 %v691, %v690
  %v745 = vpack.c.bf16 %v693, %v692
  %v746 = vpack.c.bf16 %v695, %v694
  %v747 = vpack.c.bf16 %v697, %v696
  %v748 = vpack.c.bf16 %v699, %v698
  %v749 = vpack.c.bf16 %v701, %v700
  %v750 = vpack.c.bf16 %v703, %v702
  %v751 = vpack.c.bf16 %v705, %v704
  %v752 = vpack.c.bf16 %v707, %v706
  %v753 = vpack.c.bf16 %v709, %v708
  %v754 = vpack.c.bf16 %v711, %v710
  %v755 = vpack.c.bf16 %v713, %v712
  %v756 = vpack.c.bf16 %v715, %v714
  %v757 = vpack.c.bf16 %v717, %v716
  %v758 = vpack.c.bf16 %v719, %v718
  %v759 = vpack.c.bf16 %v721, %v720
  %v760 = vpack.c.bf16 %v723, %v722
  %v761 = vpack.c.bf16 %v725, %v724
  %v762 = vpack.c.bf16 %v727, %v726
  %v763 = vpack.c.bf16 %v729, %v728
  %v764 = vpack.c.bf16 %v731, %v730
  %v765 = vpack.c.bf16 %v733, %v732
  %v766 = vpack.c.bf16 %v734, %v734
  %v767 = vld [vmem:[%s3] sm:$0xf]
  %v768 = vld [vmem:[%s3 + $0x4] sm:$0xf]
  %v769 = vld [vmem:[%s3 + $0x8] sm:$0xf]
  %v770 = vld [vmem:[%s3 + $0xc] sm:$0xf]
  %v771 = vld [vmem:[%s3 + $0x10] sm:$0xf]
  %v772 = vld [vmem:[%s3 + $0x14] sm:$0xf]
  %v773 = vld [vmem:[%s3 + $0x18] sm:$0xf]
  %v774 = vld [vmem:[%s3 + $0x1c] sm:$0xf]
  %v775 = vld [vmem:[%s4] sm:$0x1]
  %v777 = vlaneseq
  %v778 = vshrl.u32 %v777, 7
  %v779 = vsub.s32 0, %v778
  %v780 = vrot.slane %v775, %v779
  %v790 = vunpack.c.l.b16 %v767
  %v791 = vunpack.c.l.b16 %v768
  %v792 = vunpack.c.l.b16 %v769
  %v793 = vunpack.c.l.b16 %v770
  %v794 = vunpack.c.l.b16 %v771
  %v795 = vunpack.c.l.b16 %v772
  %v796 = vunpack.c.l.b16 %v773
  %v797 = vunpack.c.l.b16 %v774
  %v798 = vpack.c.b16 %v791, %v790
  %v799 = vpack.c.b16 %v793, %v792
  %v800 = vpack.c.b16 %v795, %v794
  %v801 = vpack.c.b16 %v797, %v796
  %vm806 = vcmask 523264
  %v808 = vsel %vm806, %v735, 0
  %v811 = vsel %vm806, %v736, 0
  %v814 = vsel %vm806, %v737, 0
  %v817 = vsel %vm806, %v738, 0
  %v820 = vsel %vm806, %v739, 0
  %v823 = vsel %vm806, %v740, 0
  %v826 = vsel %vm806, %v741, 0
  %v829 = vsel %vm806, %v742, 0
  %v832 = vsel %vm806, %v743, 0
  %v835 = vsel %vm806, %v744, 0
  %v838 = vsel %vm806, %v745, 0
  %v841 = vsel %vm806, %v746, 0
  %v844 = vsel %vm806, %v747, 0
  %v847 = vsel %vm806, %v748, 0
  %v850 = vsel %vm806, %v749, 0
  %v853 = vsel %vm806, %v750, 0
  %v856 = vsel %vm806, %v751, 0
  %v859 = vsel %vm806, %v752, 0
  %v862 = vsel %vm806, %v753, 0
  %v865 = vsel %vm806, %v754, 0
  %v868 = vsel %vm806, %v755, 0
  %v871 = vsel %vm806, %v756, 0
  %v874 = vsel %vm806, %v757, 0
  %v877 = vsel %vm806, %v758, 0
  %v880 = vsel %vm806, %v759, 0
  %v883 = vsel %vm806, %v760, 0
  %v886 = vsel %vm806, %v761, 0
  %v889 = vsel %vm806, %v762, 0
  %v892 = vsel %vm806, %v763, 0
  %v895 = vsel %vm806, %v764, 0
  %v898 = vsel %vm806, %v765, 0
  %v901 = vsel %vm806, %v766, 0
  %903 = vmatprep.subr.bf16.mxu0 0
  %904 = vmatpush1.bf16.msra.mxu0 %v798
  %905 = vmatprep.subr.bf16.mxu0 0
  %906 = vmatpush1.bf16.msra.mxu0 %v799
  %907 = vmatprep.subr.bf16.mxu0 0
  %908 = vmatpush1.bf16.msra.mxu0 %v800
  %909 = vmatprep.subr.bf16.mxu0 0
  %910 = vmatpush1.bf16.msra.mxu0 %v801
  %911 = vmatprep.subr.bf16.mxu0 0
  %912 = vmatpush1.bf16.msra.mxu0 0
  %913 = vmatprep.subr.bf16.mxu0 0
  %914 = vmatpush1.bf16.msra.mxu0 0
  %915 = vmatprep.subr.bf16.mxu0 0
  %916 = vmatpush1.bf16.msra.mxu0 0
  %917 = vmatprep.subr.bf16.mxu0 0
  %918 = vmatpush1.bf16.msra.mxu0 0
  %919 = vmatprep.subr.bf16.mxu0 0
  %920 = vmatpush1.bf16.msra.mxu0 0
  %921 = vmatprep.subr.bf16.mxu0 0
  %922 = vmatpush1.bf16.msra.mxu0 0
  %923 = vmatprep.subr.bf16.mxu0 0
  %924 = vmatpush1.bf16.msra.mxu0 0
  %925 = vmatprep.subr.bf16.mxu0 0
  %926 = vmatpush1.bf16.msra.mxu0 0
  %927 = vmatprep.subr.bf16.mxu0 0
  %928 = vmatpush1.bf16.msra.mxu0 0
  %929 = vmatprep.subr.bf16.mxu0 0
  %930 = vmatpush1.bf16.msra.mxu0 0
  %931 = vmatprep.subr.bf16.mxu0 0
  %932 = vmatpush1.bf16.msra.mxu0 0
  %933 = vmatprep.subr.bf16.mxu0 0
  %934 = vmatpush1.bf16.msra.mxu0 0
  %935 = vmatprep.mubr.bf16.mxu0 0
  %936 = vmatmul.mubr.bf16.gmra.mrb[0].mxu0 %v808
  %v937 = vpop.f32.mrb[0].mxu0
  %v938 = vadd.f32 %v780, %v937
  %v939 = vpop.f32.mrb[0].mxu0
  %v940 = vpop.f32.mrb[0].mxu0
  %v941 = vadd.f32 %v780, %v940
  %v942 = vpop.f32.mrb[0].mxu0
  %943 = vmatprep.mubr.bf16.mxu0 0
  %944 = vmatmul.mubr.bf16.gmra.mrb[0].mxu0 %v811
  %v945 = vpop.f32.mrb[0].mxu0
  %v946 = vadd.f32 %v780, %v945
  %v947 = vpop.f32.mrb[0].mxu0
  %v948 = vpop.f32.mrb[0].mxu0
  %v949 = vadd.f32 %v780, %v948
  %v950 = vpop.f32.mrb[0].mxu0
  %951 = vmatprep.mubr.bf16.mxu0 0
  %952 = vmatmul.mubr.bf16.gmra.mrb[0].mxu0 %v814
  %v953 = vpop.f32.mrb[0].mxu0
  %v954 = vadd.f32 %v780, %v953
  %v955 = vpop.f32.mrb[0].mxu0
  %v956 = vpop.f32.mrb[0].mxu0
  %v957 = vadd.f32 %v780, %v956
  %v958 = vpop.f32.mrb[0].mxu0
  %959 = vmatprep.mubr.bf16.mxu0 0
  %960 = vmatmul.mubr.bf16.gmra.mrb[0].mxu0 %v817
  %v961 = vpop.f32.mrb[0].mxu0
  %v962 = vadd.f32 %v780, %v961
  %v963 = vpop.f32.mrb[0].mxu0
  %v964 = vpop.f32.mrb[0].mxu0
  %v965 = vadd.f32 %v780, %v964
  %v966 = vpop.f32.mrb[0].mxu0
  %967 = vmatprep.mubr.bf16.mxu0 0
  %968 = vmatmul.mubr.bf16.gmra.mrb[0].mxu0 %v820
  %v969 = vpop.f32.mrb[0].mxu0
  %v970 = vadd.f32 %v780, %v969
  %v971 = vpop.f32.mrb[0].mxu0
  %v972 = vpop.f32.mrb[0].mxu0
  %v973 = vadd.f32 %v780, %v972
  %v974 = vpop.f32.mrb[0].mxu0
  %975 = vmatprep.mubr.bf16.mxu0 0
  %976 = vmatmul.mubr.bf16.gmra.mrb[0].mxu0 %v823
  %v977 = vpop.f32.mrb[0].mxu0
  %v978 = vadd.f32 %v780, %v977
  %v979 = vpop.f32.mrb[0].mxu0
  %v980 = vpop.f32.mrb[0].mxu0
  %v981 = vadd.f32 %v780, %v980
  %v982 = vpop.f32.mrb[0].mxu0
  %983 = vmatprep.mubr.bf16.mxu0 0
  %984 = vmatmul.mubr.bf16.gmra.mrb[0].mxu0 %v826
  %v985 = vpop.f32.mrb[0].mxu0
  %v986 = vadd.f32 %v780, %v985
  %v987 = vpop.f32.mrb[0].mxu0
  %v988 = vpop.f32.mrb[0].mxu0
  %v989 = vadd.f32 %v780, %v988
  %v990 = vpop.f32.mrb[0].mxu0
  %991 = vmatprep.mubr.bf16.mxu0 0
  %992 = vmatmul.mubr.bf16.gmra.mrb[0].mxu0 %v829
  %v993 = vpop.f32.mrb[0].mxu0
  %v994 = vadd.f32 %v780, %v993
  %v995 = vpop.f32.mrb[0].mxu0
  %v996 = vpop.f32.mrb[0].mxu0
  %v997 = vadd.f32 %v780, %v996
  %v998 = vpop.f32.mrb[0].mxu0
  %999 = vmatprep.mubr.bf16.mxu0 0
  %1000 = vmatmul.mubr.bf16.gmra.mrb[0].mxu0 %v832
  %v1001 = vpop.f32.mrb[0].mxu0
  %v1002 = vadd.f32 %v780, %v1001
  %v1003 = vpop.f32.mrb[0].mxu0
  %v1004 = vpop.f32.mrb[0].mxu0
  %v1005 = vadd.f32 %v780, %v1004
  %v1006 = vpop.f32.mrb[0].mxu0
  %1007 = vmatprep.mubr.bf16.mxu0 0
  %1008 = vmatmul.mubr.bf16.gmra.mrb[0].mxu0 %v835
  %v1009 = vpop.f32.mrb[0].mxu0
  %v1010 = vadd.f32 %v780, %v1009
  %v1011 = vpop.f32.mrb[0].mxu0
  %v1012 = vpop.f32.mrb[0].mxu0
  %v1013 = vadd.f32 %v780, %v1012
  %v1014 = vpop.f32.mrb[0].mxu0
  %1015 = vmatprep.mubr.bf16.mxu0 0
  %1016 = vmatmul.mubr.bf16.gmra.mrb[0].mxu0 %v838
  %v1017 = vpop.f32.mrb[0].mxu0
  %v1018 = vadd.f32 %v780, %v1017
  %v1019 = vpop.f32.mrb[0].mxu0
  %v1020 = vpop.f32.mrb[0].mxu0
  %v1021 = vadd.f32 %v780, %v1020
  %v1022 = vpop.f32.mrb[0].mxu0
  %1023 = vmatprep.mubr.bf16.mxu0 0
  %1024 = vmatmul.mubr.bf16.gmra.mrb[0].mxu0 %v841
  %v1025 = vpop.f32.mrb[0].mxu0
  %v1026 = vadd.f32 %v780, %v1025
  %v1027 = vpop.f32.mrb[0].mxu0
  %v1028 = vpop.f32.mrb[0].mxu0
  %v1029 = vadd.f32 %v780, %v1028
  %v1030 = vpop.f32.mrb[0].mxu0
  %1031 = vmatprep.mubr.bf16.mxu0 0
  %1032 = vmatmul.mubr.bf16.gmra.mrb[0].mxu0 %v844
  %v1033 = vpop.f32.mrb[0].mxu0
  %v1034 = vadd.f32 %v780, %v1033
  %v1035 = vpop.f32.mrb[0].mxu0
  %v1036 = vpop.f32.mrb[0].mxu0
  %v1037 = vadd.f32 %v780, %v1036
  %v1038 = vpop.f32.mrb[0].mxu0
  %1039 = vmatprep.mubr.bf16.mxu0 0
  %1040 = vmatmul.mubr.bf16.gmra.mrb[0].mxu0 %v847
  %v1041 = vpop.f32.mrb[0].mxu0
  %v1042 = vadd.f32 %v780, %v1041
  %v1043 = vpop.f32.mrb[0].mxu0
  %v1044 = vpop.f32.mrb[0].mxu0
  %v1045 = vadd.f32 %v780, %v1044
  %v1046 = vpop.f32.mrb[0].mxu0
  %1047 = vmatprep.mubr.bf16.mxu0 0
  %1048 = vmatmul.mubr.bf16.gmra.mrb[0].mxu0 %v850
  %v1049 = vpop.f32.mrb[0].mxu0
  %v1050 = vadd.f32 %v780, %v1049
  %v1051 = vpop.f32.mrb[0].mxu0
  %v1052 = vpop.f32.mrb[0].mxu0
  %v1053 = vadd.f32 %v780, %v1052
  %v1054 = vpop.f32.mrb[0].mxu0
  %1055 = vmatprep.mubr.bf16.mxu0 0
  %1056 = vmatmul.mubr.bf16.gmra.mrb[0].mxu0 %v853
  %v1057 = vpop.f32.mrb[0].mxu0
  %v1058 = vadd.f32 %v780, %v1057
  %v1059 = vpop.f32.mrb[0].mxu0
  %v1060 = vpop.f32.mrb[0].mxu0
  %v1061 = vadd.f32 %v780, %v1060
  %v1062 = vpop.f32.mrb[0].mxu0
  %1063 = vmatprep.mubr.bf16.mxu0 0
  %1064 = vmatmul.mubr.bf16.gmra.mrb[0].mxu0 %v856
  %v1065 = vpop.f32.mrb[0].mxu0
  %v1066 = vadd.f32 %v780, %v1065
  %v1067 = vpop.f32.mrb[0].mxu0
  %v1068 = vpop.f32.mrb[0].mxu0
  %v1069 = vadd.f32 %v780, %v1068
  %v1070 = vpop.f32.mrb[0].mxu0
  %1071 = vmatprep.mubr.bf16.mxu0 0
  %1072 = vmatmul.mubr.bf16.gmra.mrb[0].mxu0 %v859
  %v1073 = vpop.f32.mrb[0].mxu0
  %v1074 = vadd.f32 %v780, %v1073
  %v1075 = vpop.f32.mrb[0].mxu0
  %v1076 = vpop.f32.mrb[0].mxu0
  %v1077 = vadd.f32 %v780, %v1076
  %v1078 = vpop.f32.mrb[0].mxu0
  %1079 = vmatprep.mubr.bf16.mxu0 0
  %1080 = vmatmul.mubr.bf16.gmra.mrb[0].mxu0 %v862
  %v1081 = vpop.f32.mrb[0].mxu0
  %v1082 = vadd.f32 %v780, %v1081
  %v1083 = vpop.f32.mrb[0].mxu0
  %v1084 = vpop.f32.mrb[0].mxu0
  %v1085 = vadd.f32 %v780, %v1084
  %v1086 = vpop.f32.mrb[0].mxu0
  %1087 = vmatprep.mubr.bf16.mxu0 0
  %1088 = vmatmul.mubr.bf16.gmra.mrb[0].mxu0 %v865
  %v1089 = vpop.f32.mrb[0].mxu0
  %v1090 = vadd.f32 %v780, %v1089
  %v1091 = vpop.f32.mrb[0].mxu0
  %v1092 = vpop.f32.mrb[0].mxu0
  %v1093 = vadd.f32 %v780, %v1092
  %v1094 = vpop.f32.mrb[0].mxu0
  %1095 = vmatprep.mubr.bf16.mxu0 0
  %1096 = vmatmul.mubr.bf16.gmra.mrb[0].mxu0 %v868
  %v1097 = vpop.f32.mrb[0].mxu0
  %v1098 = vadd.f32 %v780, %v1097
  %v1099 = vpop.f32.mrb[0].mxu0
  %v1100 = vpop.f32.mrb[0].mxu0
  %v1101 = vadd.f32 %v780, %v1100
  %v1102 = vpop.f32.mrb[0].mxu0
  %1103 = vmatprep.mubr.bf16.mxu0 0
  %1104 = vmatmul.mubr.bf16.gmra.mrb[0].mxu0 %v871
  %v1105 = vpop.f32.mrb[0].mxu0
  %v1106 = vadd.f32 %v780, %v1105
  %v1107 = vpop.f32.mrb[0].mxu0
  %v1108 = vpop.f32.mrb[0].mxu0
  %v1109 = vadd.f32 %v780, %v1108
  %v1110 = vpop.f32.mrb[0].mxu0
  %1111 = vmatprep.mubr.bf16.mxu0 0
  %1112 = vmatmul.mubr.bf16.gmra.mrb[0].mxu0 %v874
  %v1113 = vpop.f32.mrb[0].mxu0
  %v1114 = vadd.f32 %v780, %v1113
  %v1115 = vpop.f32.mrb[0].mxu0
  %v1116 = vpop.f32.mrb[0].mxu0
  %v1117 = vadd.f32 %v780, %v1116
  %v1118 = vpop.f32.mrb[0].mxu0
  %1119 = vmatprep.mubr.bf16.mxu0 0
  %1120 = vmatmul.mubr.bf16.gmra.mrb[0].mxu0 %v877
  %v1121 = vpop.f32.mrb[0].mxu0
  %v1122 = vadd.f32 %v780, %v1121
  %v1123 = vpop.f32.mrb[0].mxu0
  %v1124 = vpop.f32.mrb[0].mxu0
  %v1125 = vadd.f32 %v780, %v1124
  %v1126 = vpop.f32.mrb[0].mxu0
  %1127 = vmatprep.mubr.bf16.mxu0 0
  %1128 = vmatmul.mubr.bf16.gmra.mrb[0].mxu0 %v880
  %v1129 = vpop.f32.mrb[0].mxu0
  %v1130 = vadd.f32 %v780, %v1129
  %v1131 = vpop.f32.mrb[0].mxu0
  %v1132 = vpop.f32.mrb[0].mxu0
  %v1133 = vadd.f32 %v780, %v1132
  %v1134 = vpop.f32.mrb[0].mxu0
  %1135 = vmatprep.mubr.bf16.mxu0 0
  %1136 = vmatmul.mubr.bf16.gmra.mrb[0].mxu0 %v883
  %v1137 = vpop.f32.mrb[0].mxu0
  %v1138 = vadd.f32 %v780, %v1137
  %v1139 = vpop.f32.mrb[0].mxu0
  %v1140 = vpop.f32.mrb[0].mxu0
  %v1141 = vadd.f32 %v780, %v1140
  %v1142 = vpop.f32.mrb[0].mxu0
  %1143 = vmatprep.mubr.bf16.mxu0 0
  %1144 = vmatmul.mubr.bf16.gmra.mrb[0].mxu0 %v886
  %v1145 = vpop.f32.mrb[0].mxu0
  %v1146 = vadd.f32 %v780, %v1145
  %v1147 = vpop.f32.mrb[0].mxu0
  %v1148 = vpop.f32.mrb[0].mxu0
  %v1149 = vadd.f32 %v780, %v1148
  %v1150 = vpop.f32.mrb[0].mxu0
  %1151 = vmatprep.mubr.bf16.mxu0 0
  %1152 = vmatmul.mubr.bf16.gmra.mrb[0].mxu0 %v889
  %v1153 = vpop.f32.mrb[0].mxu0
  %v1154 = vadd.f32 %v780, %v1153
  %v1155 = vpop.f32.mrb[0].mxu0
  %v1156 = vpop.f32.mrb[0].mxu0
  %v1157 = vadd.f32 %v780, %v1156
  %v1158 = vpop.f32.mrb[0].mxu0
  %1159 = vmatprep.mubr.bf16.mxu0 0
  %1160 = vmatmul.mubr.bf16.gmra.mrb[0].mxu0 %v892
  %v1161 = vpop.f32.mrb[0].mxu0
  %v1162 = vadd.f32 %v780, %v1161
  %v1163 = vpop.f32.mrb[0].mxu0
  %v1164 = vpop.f32.mrb[0].mxu0
  %v1165 = vadd.f32 %v780, %v1164
  %v1166 = vpop.f32.mrb[0].mxu0
  %1167 = vmatprep.mubr.bf16.mxu0 0
  %1168 = vmatmul.mubr.bf16.gmra.mrb[0].mxu0 %v895
  %v1169 = vpop.f32.mrb[0].mxu0
  %v1170 = vadd.f32 %v780, %v1169
  %v1171 = vpop.f32.mrb[0].mxu0
  %v1172 = vpop.f32.mrb[0].mxu0
  %v1173 = vadd.f32 %v780, %v1172
  %v1174 = vpop.f32.mrb[0].mxu0
  %1175 = vmatprep.mubr.bf16.mxu0 0
  %1176 = vmatmul.mubr.bf16.gmra.mrb[0].mxu0 %v898
  %v1177 = vpop.f32.mrb[0].mxu0
  %v1178 = vadd.f32 %v780, %v1177
  %v1179 = vpop.f32.mrb[0].mxu0
  %v1180 = vpop.f32.mrb[0].mxu0
  %v1181 = vadd.f32 %v780, %v1180
  %v1182 = vpop.f32.mrb[0].mxu0
  %1183 = vmatprep.mubr.bf16.mxu0 0
  %1184 = vmatmul.mubr.bf16.gmra.mrb[0].mxu0 %v901
  %v1185 = vpop.f32.mrb[0].mxu0
  %v1186 = vadd.f32 %v780, %v1185
  %v1187 = vpop.f32.mrb[0].mxu0
  %v1188 = vpop.f32.mrb[0].mxu0
  %v1189 = vpop.f32.mrb[0].mxu0
  %1190 = vdwg.mxu0
  %v1191 = vmax.f32 %v938, 0.0
  %v1192 = vmax.f32 %v941, 0.0
  %v1193 = vmax.f32 %v946, 0.0
  %v1194 = vmax.f32 %v949, 0.0
  %v1195 = vmax.f32 %v954, 0.0
  %v1196 = vmax.f32 %v957, 0.0
  %v1197 = vmax.f32 %v962, 0.0
  %v1198 = vmax.f32 %v965, 0.0
  %v1199 = vmax.f32 %v970, 0.0
  %v1200 = vmax.f32 %v973, 0.0
  %v1201 = vmax.f32 %v978, 0.0
  %v1202 = vmax.f32 %v981, 0.0
  %v1203 = vmax.f32 %v986, 0.0
  %v1204 = vmax.f32 %v989, 0.0
  %v1205 = vmax.f32 %v994, 0.0
  %v1206 = vmax.f32 %v997, 0.0
  %v1207 = vmax.f32 %v1002, 0.0
  %v1208 = vmax.f32 %v1005, 0.0
  %v1209 = vmax.f32 %v1010, 0.0
  %v1210 = vmax.f32 %v1013, 0.0
  %v1211 = vmax.f32 %v1018, 0.0
  %v1212 = vmax.f32 %v1021, 0.0
  %v1213 = vmax.f32 %v1026, 0.0
  %v1214 = vmax.f32 %v1029, 0.0
  %v1215 = vmax.f32 %v1034, 0.0
  %v1216 = vmax.f32 %v1037, 0.0
  %v1217 = vmax.f32 %v1042, 0.0
  %v1218 = vmax.f32 %v1045, 0.0
  %v1219 = vmax.f32 %v1050, 0.0
  %v1220 = vmax.f32 %v1053, 0.0
  %v1221 = vmax.f32 %v1058, 0.0
  %v1222 = vmax.f32 %v1061, 0.0
  %v1223 = vmax.f32 %v1066, 0.0
  %v1224 = vmax.f32 %v1069, 0.0
  %v1225 = vmax.f32 %v1074, 0.0
  %v1226 = vmax.f32 %v1077, 0.0
  %v1227 = vmax.f32 %v1082, 0.0
  %v1228 = vmax.f32 %v1085, 0.0
  %v1229 = vmax.f32 %v1090, 0.0
  %v1230 = vmax.f32 %v1093, 0.0
  %v1231 = vmax.f32 %v1098, 0.0
  %v1232 = vmax.f32 %v1101, 0.0
  %v1233 = vmax.f32 %v1106, 0.0
  %v1234 = vmax.f32 %v1109, 0.0
  %v1235 = vmax.f32 %v1114, 0.0
  %v1236 = vmax.f32 %v1117, 0.0
  %v1237 = vmax.f32 %v1122, 0.0
  %v1238 = vmax.f32 %v1125, 0.0
  %v1239 = vmax.f32 %v1130, 0.0
  %v1240 = vmax.f32 %v1133, 0.0
  %v1241 = vmax.f32 %v1138, 0.0
  %v1242 = vmax.f32 %v1141, 0.0
  %v1243 = vmax.f32 %v1146, 0.0
  %v1244 = vmax.f32 %v1149, 0.0
  %v1245 = vmax.f32 %v1154, 0.0
  %v1246 = vmax.f32 %v1157, 0.0
  %v1247 = vmax.f32 %v1162, 0.0
  %v1248 = vmax.f32 %v1165, 0.0
  %v1249 = vmax.f32 %v1170, 0.0
  %v1250 = vmax.f32 %v1173, 0.0
  %v1251 = vmax.f32 %v1178, 0.0
  %v1252 = vmax.f32 %v1181, 0.0
  %v1253 = vmax.f32 %v1186, 0.0
  %v1254 = vpack.c.bf16 %v1192, %v1191
  %v1255 = vpack.c.bf16 %v1194, %v1193
  %v1256 = vpack.c.bf16 %v1196, %v1195
  %v1257 = vpack.c.bf16 %v1198, %v1197
  %v1258 = vpack.c.bf16 %v1200, %v1199
  %v1259 = vpack.c.bf16 %v1202, %v1201
  %v1260 = vpack.c.bf16 %v1204, %v1203
  %v1261 = vpack.c.bf16 %v1206, %v1205
  %v1262 = vpack.c.bf16 %v1208, %v1207
  %v1263 = vpack.c.bf16 %v1210, %v1209
  %v1264 = vpack.c.bf16 %v1212, %v1211
  %v1265 = vpack.c.bf16 %v1214, %v1213
  %v1266 = vpack.c.bf16 %v1216, %v1215
  %v1267 = vpack.c.bf16 %v1218, %v1217
  %v1268 = vpack.c.bf16 %v1220, %v1219
  %v1269 = vpack.c.bf16 %v1222, %v1221
  %v1270 = vpack.c.bf16 %v1224, %v1223
  %v1271 = vpack.c.bf16 %v1226, %v1225
  %v1272 = vpack.c.bf16 %v1228, %v1227
  %v1273 = vpack.c.bf16 %v1230, %v1229
  %v1274 = vpack.c.bf16 %v1232, %v1231
  %v1275 = vpack.c.bf16 %v1234, %v1233
  %v1276 = vpack.c.bf16 %v1236, %v1235
  %v1277 = vpack.c.bf16 %v1238, %v1237
  %v1278 = vpack.c.bf16 %v1240, %v1239
  %v1279 = vpack.c.bf16 %v1242, %v1241
  %v1280 = vpack.c.bf16 %v1244, %v1243
  %v1281 = vpack.c.bf16 %v1246, %v1245
  %v1282 = vpack.c.bf16 %v1248, %v1247
  %v1283 = vpack.c.bf16 %v1250, %v1249
  %v1284 = vpack.c.bf16 %v1252, %v1251
  %v1285 = vpack.c.bf16 %v1253, %v1253
  %v1286 = vld [vmem:[%s5] sm:$0xf]
  %v1287 = vld [vmem:[%s5 + $0x4] sm:$0xf]
  %v1288 = vld [vmem:[%s5 + $0x8] sm:$0xf]
  %v1289 = vld [vmem:[%s5 + $0xc] sm:$0xf]
  %v1290 = vld [vmem:[%s5 + $0x10] sm:$0xf]
  %v1291 = vld [vmem:[%s5 + $0x14] sm:$0xf]
  %v1292 = vld [vmem:[%s5 + $0x18] sm:$0xf]
  %v1293 = vld [vmem:[%s5 + $0x1c] sm:$0xf]
  %v1294 = vld [vmem:[%s6] sm:$0x1]
  %v1296 = vlaneseq
  %v1297 = vshrl.u32 %v1296, 7
  %v1298 = vsub.s32 0, %v1297
  %v1299 = vrot.slane %v1294, %v1298
  %v1309 = vunpack.c.l.b16 %v1286
  %v1310 = vunpack.c.l.b16 %v1287
  %v1311 = vunpack.c.l.b16 %v1288
  %v1312 = vunpack.c.l.b16 %v1289
  %v1313 = vunpack.c.l.b16 %v1290
  %v1314 = vunpack.c.l.b16 %v1291
  %v1315 = vunpack.c.l.b16 %v1292
  %v1316 = vunpack.c.l.b16 %v1293
  %v1317 = vpack.c.b16 %v1310, %v1309
  %v1318 = vpack.c.b16 %v1312, %v1311
  %v1319 = vpack.c.b16 %v1314, %v1313
  %v1320 = vpack.c.b16 %v1316, %v1315
  %v1326 = vsel %vm806, %v1254, 0
  %v1329 = vsel %vm806, %v1255, 0
  %v1332 = vsel %vm806, %v1256, 0
  %v1335 = vsel %vm806, %v1257, 0
  %v1338 = vsel %vm806, %v1258, 0
  %v1341 = vsel %vm806, %v1259, 0
  %v1344 = vsel %vm806, %v1260, 0
  %v1347 = vsel %vm806, %v1261, 0
  %v1350 = vsel %vm806, %v1262, 0
  %v1353 = vsel %vm806, %v1263, 0
  %v1356 = vsel %vm806, %v1264, 0
  %v1359 = vsel %vm806, %v1265, 0
  %v1362 = vsel %vm806, %v1266, 0
  %v1365 = vsel %vm806, %v1267, 0
  %v1368 = vsel %vm806, %v1268, 0
  %v1371 = vsel %vm806, %v1269, 0
  %v1374 = vsel %vm806, %v1270, 0
  %v1377 = vsel %vm806, %v1271, 0
  %v1380 = vsel %vm806, %v1272, 0
  %v1383 = vsel %vm806, %v1273, 0
  %v1386 = vsel %vm806, %v1274, 0
  %v1389 = vsel %vm806, %v1275, 0
  %v1392 = vsel %vm806, %v1276, 0
  %v1395 = vsel %vm806, %v1277, 0
  %v1398 = vsel %vm806, %v1278, 0
  %v1401 = vsel %vm806, %v1279, 0
  %v1404 = vsel %vm806, %v1280, 0
  %v1407 = vsel %vm806, %v1281, 0
  %v1410 = vsel %vm806, %v1282, 0
  %v1413 = vsel %vm806, %v1283, 0
  %v1416 = vsel %vm806, %v1284, 0
  %v1419 = vsel %vm806, %v1285, 0
  %1421 = vmatprep.subr.bf16.mxu0 0
  %1422 = vmatpush1.bf16.msra.mxu0 %v1317
  %1423 = vmatprep.subr.bf16.mxu0 0
  %1424 = vmatpush1.bf16.msra.mxu0 %v1318
  %1425 = vmatprep.subr.bf16.mxu0 0
  %1426 = vmatpush1.bf16.msra.mxu0 %v1319
  %1427 = vmatprep.subr.bf16.mxu0 0
  %1428 = vmatpush1.bf16.msra.mxu0 %v1320
  %1429 = vmatprep.subr.bf16.mxu0 0
  %1430 = vmatpush1.bf16.msra.mxu0 0
  %1431 = vmatprep.subr.bf16.mxu0 0
  %1432 = vmatpush1.bf16.msra.mxu0 0
  %1433 = vmatprep.subr.bf16.mxu0 0
  %1434 = vmatpush1.bf16.msra.mxu0 0
  %1435 = vmatprep.subr.bf16.mxu0 0
  %1436 = vmatpush1.bf16.msra.mxu0 0
  %1437 = vmatprep.subr.bf16.mxu0 0
  %1438 = vmatpush1.bf16.msra.mxu0 0
  %1439 = vmatprep.subr.bf16.mxu0 0
  %1440 = vmatpush1.bf16.msra.mxu0 0
  %1441 = vmatprep.subr.bf16.mxu0 0
  %1442 = vmatpush1.bf16.msra.mxu0 0
  %1443 = vmatprep.subr.bf16.mxu0 0
  %1444 = vmatpush1.bf16.msra.mxu0 0
  %1445 = vmatprep.subr.bf16.mxu0 0
  %1446 = vmatpush1.bf16.msra.mxu0 0
  %1447 = vmatprep.subr.bf16.mxu0 0
  %1448 = vmatpush1.bf16.msra.mxu0 0
  %1449 = vmatprep.subr.bf16.mxu0 0
  %1450 = vmatpush1.bf16.msra.mxu0 0
  %1451 = vmatprep.subr.bf16.mxu0 0
  %1452 = vmatpush1.bf16.msra.mxu0 0
  %1453 = vmatprep.mubr.bf16.mxu0 0
  %1454 = vmatmul.mubr.bf16.gmra.mrb[0].mxu0 %v1326
  %v1455 = vpop.f32.mrb[0].mxu0
  %v1456 = vadd.f32 %v1299, %v1455
  %v1457 = vpop.f32.mrb[0].mxu0
  %v1458 = vpop.f32.mrb[0].mxu0
  %v1459 = vadd.f32 %v1299, %v1458
  %v1460 = vpop.f32.mrb[0].mxu0
  %1461 = vmatprep.mubr.bf16.mxu0 0
  %1462 = vmatmul.mubr.bf16.gmra.mrb[0].mxu0 %v1329
  %v1463 = vpop.f32.mrb[0].mxu0
  %v1464 = vadd.f32 %v1299, %v1463
  %v1465 = vpop.f32.mrb[0].mxu0
  %v1466 = vpop.f32.mrb[0].mxu0
  %v1467 = vadd.f32 %v1299, %v1466
  %v1468 = vpop.f32.mrb[0].mxu0
  %1469 = vmatprep.mubr.bf16.mxu0 0
  %1470 = vmatmul.mubr.bf16.gmra.mrb[0].mxu0 %v1332
  %v1471 = vpop.f32.mrb[0].mxu0
  %v1472 = vadd.f32 %v1299, %v1471
  %v1473 = vpop.f32.mrb[0].mxu0
  %v1474 = vpop.f32.mrb[0].mxu0
  %v1475 = vadd.f32 %v1299, %v1474
  %v1476 = vpop.f32.mrb[0].mxu0
  %1477 = vmatprep.mubr.bf16.mxu0 0
  %1478 = vmatmul.mubr.bf16.gmra.mrb[0].mxu0 %v1335
  %v1479 = vpop.f32.mrb[0].mxu0
  %v1480 = vadd.f32 %v1299, %v1479
  %v1481 = vpop.f32.mrb[0].mxu0
  %v1482 = vpop.f32.mrb[0].mxu0
  %v1483 = vadd.f32 %v1299, %v1482
  %v1484 = vpop.f32.mrb[0].mxu0
  %1485 = vmatprep.mubr.bf16.mxu0 0
  %1486 = vmatmul.mubr.bf16.gmra.mrb[0].mxu0 %v1338
  %v1487 = vpop.f32.mrb[0].mxu0
  %v1488 = vadd.f32 %v1299, %v1487
  %v1489 = vpop.f32.mrb[0].mxu0
  %v1490 = vpop.f32.mrb[0].mxu0
  %v1491 = vadd.f32 %v1299, %v1490
  %v1492 = vpop.f32.mrb[0].mxu0
  %1493 = vmatprep.mubr.bf16.mxu0 0
  %1494 = vmatmul.mubr.bf16.gmra.mrb[0].mxu0 %v1341
  %v1495 = vpop.f32.mrb[0].mxu0
  %v1496 = vadd.f32 %v1299, %v1495
  %v1497 = vpop.f32.mrb[0].mxu0
  %v1498 = vpop.f32.mrb[0].mxu0
  %v1499 = vadd.f32 %v1299, %v1498
  %v1500 = vpop.f32.mrb[0].mxu0
  %1501 = vmatprep.mubr.bf16.mxu0 0
  %1502 = vmatmul.mubr.bf16.gmra.mrb[0].mxu0 %v1344
  %v1503 = vpop.f32.mrb[0].mxu0
  %v1504 = vadd.f32 %v1299, %v1503
  %v1505 = vpop.f32.mrb[0].mxu0
  %v1506 = vpop.f32.mrb[0].mxu0
  %v1507 = vadd.f32 %v1299, %v1506
  %v1508 = vpop.f32.mrb[0].mxu0
  %1509 = vmatprep.mubr.bf16.mxu0 0
  %1510 = vmatmul.mubr.bf16.gmra.mrb[0].mxu0 %v1347
  %v1511 = vpop.f32.mrb[0].mxu0
  %v1512 = vadd.f32 %v1299, %v1511
  %v1513 = vpop.f32.mrb[0].mxu0
  %v1514 = vpop.f32.mrb[0].mxu0
  %v1515 = vadd.f32 %v1299, %v1514
  %v1516 = vpop.f32.mrb[0].mxu0
  %1517 = vmatprep.mubr.bf16.mxu0 0
  %1518 = vmatmul.mubr.bf16.gmra.mrb[0].mxu0 %v1350
  %v1519 = vpop.f32.mrb[0].mxu0
  %v1520 = vadd.f32 %v1299, %v1519
  %v1521 = vpop.f32.mrb[0].mxu0
  %v1522 = vpop.f32.mrb[0].mxu0
  %v1523 = vadd.f32 %v1299, %v1522
  %v1524 = vpop.f32.mrb[0].mxu0
  %1525 = vmatprep.mubr.bf16.mxu0 0
  %1526 = vmatmul.mubr.bf16.gmra.mrb[0].mxu0 %v1353
  %v1527 = vpop.f32.mrb[0].mxu0
  %v1528 = vadd.f32 %v1299, %v1527
  %v1529 = vpop.f32.mrb[0].mxu0
  %v1530 = vpop.f32.mrb[0].mxu0
  %v1531 = vadd.f32 %v1299, %v1530
  %v1532 = vpop.f32.mrb[0].mxu0
  %1533 = vmatprep.mubr.bf16.mxu0 0
  %1534 = vmatmul.mubr.bf16.gmra.mrb[0].mxu0 %v1356
  %v1535 = vpop.f32.mrb[0].mxu0
  %v1536 = vadd.f32 %v1299, %v1535
  %v1537 = vpop.f32.mrb[0].mxu0
  %v1538 = vpop.f32.mrb[0].mxu0
  %v1539 = vadd.f32 %v1299, %v1538
  %v1540 = vpop.f32.mrb[0].mxu0
  %1541 = vmatprep.mubr.bf16.mxu0 0
  %1542 = vmatmul.mubr.bf16.gmra.mrb[0].mxu0 %v1359
  %v1543 = vpop.f32.mrb[0].mxu0
  %v1544 = vadd.f32 %v1299, %v1543
  %v1545 = vpop.f32.mrb[0].mxu0
  %v1546 = vpop.f32.mrb[0].mxu0
  %v1547 = vadd.f32 %v1299, %v1546
  %v1548 = vpop.f32.mrb[0].mxu0
  %1549 = vmatprep.mubr.bf16.mxu0 0
  %1550 = vmatmul.mubr.bf16.gmra.mrb[0].mxu0 %v1362
  %v1551 = vpop.f32.mrb[0].mxu0
  %v1552 = vadd.f32 %v1299, %v1551
  %v1553 = vpop.f32.mrb[0].mxu0
  %v1554 = vpop.f32.mrb[0].mxu0
  %v1555 = vadd.f32 %v1299, %v1554
  %v1556 = vpop.f32.mrb[0].mxu0
  %1557 = vmatprep.mubr.bf16.mxu0 0
  %1558 = vmatmul.mubr.bf16.gmra.mrb[0].mxu0 %v1365
  %v1559 = vpop.f32.mrb[0].mxu0
  %v1560 = vadd.f32 %v1299, %v1559
  %v1561 = vpop.f32.mrb[0].mxu0
  %v1562 = vpop.f32.mrb[0].mxu0
  %v1563 = vadd.f32 %v1299, %v1562
  %v1564 = vpop.f32.mrb[0].mxu0
  %1565 = vmatprep.mubr.bf16.mxu0 0
  %1566 = vmatmul.mubr.bf16.gmra.mrb[0].mxu0 %v1368
  %v1567 = vpop.f32.mrb[0].mxu0
  %v1568 = vadd.f32 %v1299, %v1567
  %v1569 = vpop.f32.mrb[0].mxu0
  %v1570 = vpop.f32.mrb[0].mxu0
  %v1571 = vadd.f32 %v1299, %v1570
  %v1572 = vpop.f32.mrb[0].mxu0
  %1573 = vmatprep.mubr.bf16.mxu0 0
  %1574 = vmatmul.mubr.bf16.gmra.mrb[0].mxu0 %v1371
  %v1575 = vpop.f32.mrb[0].mxu0
  %v1576 = vadd.f32 %v1299, %v1575
  %v1577 = vpop.f32.mrb[0].mxu0
  %v1578 = vpop.f32.mrb[0].mxu0
  %v1579 = vadd.f32 %v1299, %v1578
  %v1580 = vpop.f32.mrb[0].mxu0
  %1581 = vmatprep.mubr.bf16.mxu0 0
  %1582 = vmatmul.mubr.bf16.gmra.mrb[0].mxu0 %v1374
  %v1583 = vpop.f32.mrb[0].mxu0
  %v1584 = vadd.f32 %v1299, %v1583
  %v1585 = vpop.f32.mrb[0].mxu0
  %v1586 = vpop.f32.mrb[0].mxu0
  %v1587 = vadd.f32 %v1299, %v1586
  %v1588 = vpop.f32.mrb[0].mxu0
  %1589 = vmatprep.mubr.bf16.mxu0 0
  %1590 = vmatmul.mubr.bf16.gmra.mrb[0].mxu0 %v1377
  %v1591 = vpop.f32.mrb[0].mxu0
  %v1592 = vadd.f32 %v1299, %v1591
  %v1593 = vpop.f32.mrb[0].mxu0
  %v1594 = vpop.f32.mrb[0].mxu0
  %v1595 = vadd.f32 %v1299, %v1594
  %v1596 = vpop.f32.mrb[0].mxu0
  %1597 = vmatprep.mubr.bf16.mxu0 0
  %1598 = vmatmul.mubr.bf16.gmra.mrb[0].mxu0 %v1380
  %v1599 = vpop.f32.mrb[0].mxu0
  %v1600 = vadd.f32 %v1299, %v1599
  %v1601 = vpop.f32.mrb[0].mxu0
  %v1602 = vpop.f32.mrb[0].mxu0
  %v1603 = vadd.f32 %v1299, %v1602
  %v1604 = vpop.f32.mrb[0].mxu0
  %1605 = vmatprep.mubr.bf16.mxu0 0
  %1606 = vmatmul.mubr.bf16.gmra.mrb[0].mxu0 %v1383
  %v1607 = vpop.f32.mrb[0].mxu0
  %v1608 = vadd.f32 %v1299, %v1607
  %v1609 = vpop.f32.mrb[0].mxu0
  %v1610 = vpop.f32.mrb[0].mxu0
  %v1611 = vadd.f32 %v1299, %v1610
  %v1612 = vpop.f32.mrb[0].mxu0
  %1613 = vmatprep.mubr.bf16.mxu0 0
  %1614 = vmatmul.mubr.bf16.gmra.mrb[0].mxu0 %v1386
  %v1615 = vpop.f32.mrb[0].mxu0
  %v1616 = vadd.f32 %v1299, %v1615
  %v1617 = vpop.f32.mrb[0].mxu0
  %v1618 = vpop.f32.mrb[0].mxu0
  %v1619 = vadd.f32 %v1299, %v1618
  %v1620 = vpop.f32.mrb[0].mxu0
  %1621 = vmatprep.mubr.bf16.mxu0 0
  %1622 = vmatmul.mubr.bf16.gmra.mrb[0].mxu0 %v1389
  %v1623 = vpop.f32.mrb[0].mxu0
  %v1624 = vadd.f32 %v1299, %v1623
  %v1625 = vpop.f32.mrb[0].mxu0
  %v1626 = vpop.f32.mrb[0].mxu0
  %v1627 = vadd.f32 %v1299, %v1626
  %v1628 = vpop.f32.mrb[0].mxu0
  %1629 = vmatprep.mubr.bf16.mxu0 0
  %1630 = vmatmul.mubr.bf16.gmra.mrb[0].mxu0 %v1392
  %v1631 = vpop.f32.mrb[0].mxu0
  %v1632 = vadd.f32 %v1299, %v1631
  %v1633 = vpop.f32.mrb[0].mxu0
  %v1634 = vpop.f32.mrb[0].mxu0
  %v1635 = vadd.f32 %v1299, %v1634
  %v1636 = vpop.f32.mrb[0].mxu0
  %1637 = vmatprep.mubr.bf16.mxu0 0
  %1638 = vmatmul.mubr.bf16.gmra.mrb[0].mxu0 %v1395
  %v1639 = vpop.f32.mrb[0].mxu0
  %v1640 = vadd.f32 %v1299, %v1639
  %v1641 = vpop.f32.mrb[0].mxu0
  %v1642 = vpop.f32.mrb[0].mxu0
  %v1643 = vadd.f32 %v1299, %v1642
  %v1644 = vpop.f32.mrb[0].mxu0
  %1645 = vmatprep.mubr.bf16.mxu0 0
  %1646 = vmatmul.mubr.bf16.gmra.mrb[0].mxu0 %v1398
  %v1647 = vpop.f32.mrb[0].mxu0
  %v1648 = vadd.f32 %v1299, %v1647
  %v1649 = vpop.f32.mrb[0].mxu0
  %v1650 = vpop.f32.mrb[0].mxu0
  %v1651 = vadd.f32 %v1299, %v1650
  %v1652 = vpop.f32.mrb[0].mxu0
  %1653 = vmatprep.mubr.bf16.mxu0 0
  %1654 = vmatmul.mubr.bf16.gmra.mrb[0].mxu0 %v1401
  %v1655 = vpop.f32.mrb[0].mxu0
  %v1656 = vadd.f32 %v1299, %v1655
  %v1657 = vpop.f32.mrb[0].mxu0
  %v1658 = vpop.f32.mrb[0].mxu0
  %v1659 = vadd.f32 %v1299, %v1658
  %v1660 = vpop.f32.mrb[0].mxu0
  %1661 = vmatprep.mubr.bf16.mxu0 0
  %1662 = vmatmul.mubr.bf16.gmra.mrb[0].mxu0 %v1404
  %v1663 = vpop.f32.mrb[0].mxu0
  %v1664 = vadd.f32 %v1299, %v1663
  %v1665 = vpop.f32.mrb[0].mxu0
  %v1666 = vpop.f32.mrb[0].mxu0
  %v1667 = vadd.f32 %v1299, %v1666
  %v1668 = vpop.f32.mrb[0].mxu0
  %1669 = vmatprep.mubr.bf16.mxu0 0
  %1670 = vmatmul.mubr.bf16.gmra.mrb[0].mxu0 %v1407
  %v1671 = vpop.f32.mrb[0].mxu0
  %v1672 = vadd.f32 %v1299, %v1671
  %v1673 = vpop.f32.mrb[0].mxu0
  %v1674 = vpop.f32.mrb[0].mxu0
  %v1675 = vadd.f32 %v1299, %v1674
  %v1676 = vpop.f32.mrb[0].mxu0
  %1677 = vmatprep.mubr.bf16.mxu0 0
  %1678 = vmatmul.mubr.bf16.gmra.mrb[0].mxu0 %v1410
  %v1679 = vpop.f32.mrb[0].mxu0
  %v1680 = vadd.f32 %v1299, %v1679
  %v1681 = vpop.f32.mrb[0].mxu0
  %v1682 = vpop.f32.mrb[0].mxu0
  %v1683 = vadd.f32 %v1299, %v1682
  %v1684 = vpop.f32.mrb[0].mxu0
  %1685 = vmatprep.mubr.bf16.mxu0 0
  %1686 = vmatmul.mubr.bf16.gmra.mrb[0].mxu0 %v1413
  %v1687 = vpop.f32.mrb[0].mxu0
  %v1688 = vadd.f32 %v1299, %v1687
  %v1689 = vpop.f32.mrb[0].mxu0
  %v1690 = vpop.f32.mrb[0].mxu0
  %v1691 = vadd.f32 %v1299, %v1690
  %v1692 = vpop.f32.mrb[0].mxu0
  %1693 = vmatprep.mubr.bf16.mxu0 0
  %1694 = vmatmul.mubr.bf16.gmra.mrb[0].mxu0 %v1416
  %v1695 = vpop.f32.mrb[0].mxu0
  %v1696 = vadd.f32 %v1299, %v1695
  %v1697 = vpop.f32.mrb[0].mxu0
  %v1698 = vpop.f32.mrb[0].mxu0
  %v1699 = vadd.f32 %v1299, %v1698
  %v1700 = vpop.f32.mrb[0].mxu0
  %1701 = vmatprep.mubr.bf16.mxu0 0
  %1702 = vmatmul.mubr.bf16.gmra.mrb[0].mxu0 %v1419
  %v1703 = vpop.f32.mrb[0].mxu0
  %v1704 = vadd.f32 %v1299, %v1703
  %v1705 = vpop.f32.mrb[0].mxu0
  %v1706 = vpop.f32.mrb[0].mxu0
  %v1707 = vpop.f32.mrb[0].mxu0
  %1708 = vdwg.mxu0
  %vm1709 = vcmask 15360
  %1710 = vst.msk [vmem:[%s7] sm:$0xff] %vm1709, %v1456
  %1711 = vst.msk [vmem:[%s7 + $0x8] sm:$0xff] %vm1709, %v1459
  %1712 = vst.msk [vmem:[%s7 + $0x10] sm:$0xff] %vm1709, %v1464
  %1713 = vst.msk [vmem:[%s7 + $0x18] sm:$0xff] %vm1709, %v1467
  %1714 = vst.msk [vmem:[%s7 + $0x20] sm:$0xff] %vm1709, %v1472
  %1715 = vst.msk [vmem:[%s7 + $0x28] sm:$0xff] %vm1709, %v1475
  %1716 = vst.msk [vmem:[%s7 + $0x30] sm:$0xff] %vm1709, %v1480
  %1717 = vst.msk [vmem:[%s7 + $0x38] sm:$0xff] %vm1709, %v1483
  %1718 = vst.msk [vmem:[%s7 + $0x40] sm:$0xff] %vm1709, %v1488
  %1719 = vst.msk [vmem:[%s7 + $0x48] sm:$0xff] %vm1709, %v1491
  %1720 = vst.msk [vmem:[%s7 + $0x50] sm:$0xff] %vm1709, %v1496
  %1721 = vst.msk [vmem:[%s7 + $0x58] sm:$0xff] %vm1709, %v1499
  %1722 = vst.msk [vmem:[%s7 + $0x60] sm:$0xff] %vm1709, %v1504
  %1723 = vst.msk [vmem:[%s7 + $0x68] sm:$0xff] %vm1709, %v1507
  %1724 = vst.msk [vmem:[%s7 + $0x70] sm:$0xff] %vm1709, %v1512
  %1725 = vst.msk [vmem:[%s7 + $0x78] sm:$0xff] %vm1709, %v1515
  %1726 = vst.msk [vmem:[%s7 + $0x80] sm:$0xff] %vm1709, %v1520
  %1727 = vst.msk [vmem:[%s7 + $0x88] sm:$0xff] %vm1709, %v1523
  %1728 = vst.msk [vmem:[%s7 + $0x90] sm:$0xff] %vm1709, %v1528
  %1729 = vst.msk [vmem:[%s7 + $0x98] sm:$0xff] %vm1709, %v1531
  %1730 = vst.msk [vmem:[%s7 + $0xa0] sm:$0xff] %vm1709, %v1536
  %1731 = vst.msk [vmem:[%s7 + $0xa8] sm:$0xff] %vm1709, %v1539
  %1732 = vst.msk [vmem:[%s7 + $0xb0] sm:$0xff] %vm1709, %v1544
  %1733 = vst.msk [vmem:[%s7 + $0xb8] sm:$0xff] %vm1709, %v1547
  %1734 = vst.msk [vmem:[%s7 + $0xc0] sm:$0xff] %vm1709, %v1552
  %1735 = vst.msk [vmem:[%s7 + $0xc8] sm:$0xff] %vm1709, %v1555
  %1736 = vst.msk [vmem:[%s7 + $0xd0] sm:$0xff] %vm1709, %v1560
  %1737 = vst.msk [vmem:[%s7 + $0xd8] sm:$0xff] %vm1709, %v1563
  %1738 = vst.msk [vmem:[%s7 + $0xe0] sm:$0xff] %vm1709, %v1568
  %1739 = vst.msk [vmem:[%s7 + $0xe8] sm:$0xff] %vm1709, %v1571
  %1740 = vst.msk [vmem:[%s7 + $0xf0] sm:$0xff] %vm1709, %v1576
  %1741 = vst.msk [vmem:[%s7 + $0xf8] sm:$0xff] %vm1709, %v1579
  %1742 = vst.msk [vmem:[%s7 + $0x100] sm:$0xff] %vm1709, %v1584
  %1743 = vst.msk [vmem:[%s7 + $0x108] sm:$0xff] %vm1709, %v1587
  %1744 = vst.msk [vmem:[%s7 + $0x110] sm:$0xff] %vm1709, %v1592
  %1745 = vst.msk [vmem:[%s7 + $0x118] sm:$0xff] %vm1709, %v1595
  %1746 = vst.msk [vmem:[%s7 + $0x120] sm:$0xff] %vm1709, %v1600
  %1747 = vst.msk [vmem:[%s7 + $0x128] sm:$0xff] %vm1709, %v1603
  %1748 = vst.msk [vmem:[%s7 + $0x130] sm:$0xff] %vm1709, %v1608
  %1749 = vst.msk [vmem:[%s7 + $0x138] sm:$0xff] %vm1709, %v1611
  %1750 = vst.msk [vmem:[%s7 + $0x140] sm:$0xff] %vm1709, %v1616
  %1751 = vst.msk [vmem:[%s7 + $0x148] sm:$0xff] %vm1709, %v1619
  %1752 = vst.msk [vmem:[%s7 + $0x150] sm:$0xff] %vm1709, %v1624
  %1753 = vst.msk [vmem:[%s7 + $0x158] sm:$0xff] %vm1709, %v1627
  %1754 = vst.msk [vmem:[%s7 + $0x160] sm:$0xff] %vm1709, %v1632
  %1755 = vst.msk [vmem:[%s7 + $0x168] sm:$0xff] %vm1709, %v1635
  %1756 = vst.msk [vmem:[%s7 + $0x170] sm:$0xff] %vm1709, %v1640
  %1757 = vst.msk [vmem:[%s7 + $0x178] sm:$0xff] %vm1709, %v1643
  %1758 = vst.msk [vmem:[%s7 + $0x180] sm:$0xff] %vm1709, %v1648
  %1759 = vst.msk [vmem:[%s7 + $0x188] sm:$0xff] %vm1709, %v1651
  %1760 = vst.msk [vmem:[%s7 + $0x190] sm:$0xff] %vm1709, %v1656
  %1761 = vst.msk [vmem:[%s7 + $0x198] sm:$0xff] %vm1709, %v1659
  %1762 = vst.msk [vmem:[%s7 + $0x1a0] sm:$0xff] %vm1709, %v1664
  %1763 = vst.msk [vmem:[%s7 + $0x1a8] sm:$0xff] %vm1709, %v1667
  %1764 = vst.msk [vmem:[%s7 + $0x1b0] sm:$0xff] %vm1709, %v1672
  %1765 = vst.msk [vmem:[%s7 + $0x1b8] sm:$0xff] %vm1709, %v1675
  %1766 = vst.msk [vmem:[%s7 + $0x1c0] sm:$0xff] %vm1709, %v1680
  %1767 = vst.msk [vmem:[%s7 + $0x1c8] sm:$0xff] %vm1709, %v1683
  %1768 = vst.msk [vmem:[%s7 + $0x1d0] sm:$0xff] %vm1709, %v1688
  %1769 = vst.msk [vmem:[%s7 + $0x1d8] sm:$0xff] %vm1709, %v1691
  %1770 = vst.msk [vmem:[%s7 + $0x1e0] sm:$0xff] %vm1709, %v1696
  %1771 = vst.msk [vmem:[%s7 + $0x1e8] sm:$0xff] %vm1709, %v1699
  %1772 = vst.msk [vmem:[%s7 + $0x1f0] sm:$0xff] %vm1709, %v1704
  // Predicated region
  $region30: #{dqn_forward.1} parent=0 // pred_check
    _
  $region31: #{dqn_forward.1} parent=0 // pred_check_branch
    %1774 = sbr.rel (0) target = $region33
  $region32: #{dqn_forward.1} parent=0 // pred_region
    _
  $region33: #{dqn_forward.1} parent=0 // pred_fallthru
    _
  // Predicated region
  $region34: #{dqn_forward.1} parent=0 // pred_check
    _
  $region35: #{dqn_forward.1} parent=0 // pred_check_branch
    %1776 = sbr.rel (0) target = $region37
  $region36: #{dqn_forward.1} parent=0 // pred_region
    _
  $region37: #{dqn_forward.1} parent=0 // pred_fallthru
    _

</llo_original>
